<compile_context>
chip_gen: v5e
topology: v5e:2x2
jax: 0.10.0
libtpu: 0.0.40
codegen_flags: <defaults>
</compile_context>

<pallas_src>
import jax
import jax.numpy as jnp
import numpy as np
from jax.experimental import pallas as pl
from jax.experimental.pallas import tpu as pltpu

EPS = 1e-5
K1, K2 = 5, 3          # conv kernel sizes (static, from the PyTorch module)
KPAD = 128             # conv1 im2col contraction padded to a lane-dense 128
NC_PAD = 128           # FC output padded to a lane-dense 128 columns


# ---------------------------------------------------------------------------
# Fused Pallas kernel: conv1+bias+ReLU+pool -> conv2+bias+ReLU+pool -> LSTM -> FC
# (H-mean, channels-last transpose, padding and conv1 im2col done in the wrapper)
# ---------------------------------------------------------------------------
def fused_forward_kernel(a1_ref, w1_ref, b1_ref, w2_ref, b2_ref,
                         wih_ref, whh_ref, bl_ref, wfc_ref, bfc_ref,
                         o_ref, x2pad_ref):
    # a1   : (B*L1, 128)   bf16  conv1 im2col LHS (15 real cols, zero-padded lanes)
    # w1   : (128, C1)     bf16  conv1 im2col weight * BN1 scale (rows >= 15 zero)
    # b1   : (1, C1)       f32   folded BN1 bias (includes conv bias)
    # w2   : (K2*C1, C2)   bf16  conv2 per-tap weights * BN2 scale, taps stacked on rows
    # b2   : (1, C2)       f32   folded BN2 bias
    # wih  : (C2, 4H) bf16 ; whh: (H, 4H) bf16 ; bl: (1, 4H) f32  gates in (i,f,o,g) order
    # wfc  : (H, 128) bf16 zero-padded ; bfc: (1, 128) f32
    # o    : (B, 128) f32
    # x2pad: (B, L1//2 + 2, C1) f32 VMEM scratch (conv2 zero-padded input)
    B = o_ref.shape[0]
    C1 = w1_ref.shape[1]
    C2 = w2_ref.shape[1]
    Hh = whh_ref.shape[0]
    H4 = whh_ref.shape[1]
    H3 = 3 * Hh
    L1 = a1_ref.shape[0] // B
    L1h = L1 // 2
    L2 = L1h
    T = L2 // 2

    # ---- conv1: single im2col matmul over the whole batch + bias + ReLU + pool ----
    y1 = jnp.dot(a1_ref[...], w1_ref[...], preferred_element_type=jnp.float32)
    y1 = jnp.maximum(y1 + b1_ref[...], 0.0)                       # (B*L1, C1)
    # MaxPool1d(2): rows are batch-major and L1 is even, so pairs never cross batches.
    y1 = jnp.max(y1.reshape(B * L1h, 2, C1), axis=1)              # (B*L1h, C1)

    # ---- conv2 as K2 sublane-shifted matmuls out of a pre-padded VMEM scratch ----
    x2pad_ref[...] = jnp.zeros((B, L1h + 2, C1), jnp.float32)     # pad=1 zero rows
    x2pad_ref[:, 1:L1h + 1, :] = y1.reshape(B, L1h, C1)
    x2 = x2pad_ref[...]                                           # (B, L1h+2, C1)

    acc2 = jnp.zeros((B * L2, C2), jnp.float32)
    for k in range(K2):                                           # static K2 = 3
        lhs = x2[:, k:k + L2, :].reshape(B * L2, C1).astype(jnp.bfloat16)
        acc2 = acc2 + jnp.dot(lhs, w2_ref[k * C1:(k + 1) * C1, :],
                              preferred_element_type=jnp.float32)
    y2 = jnp.maximum(acc2 + b2_ref[...], 0.0)                     # (B*L2, C2)
    y2 = jnp.max(y2.reshape(B * T, 2, C2), axis=1)                # (B*T, C2)

    # ---- LSTM: hoisted input projection + fully unrolled T-step recurrence ----
    zx = jnp.dot(y2.astype(jnp.bfloat16), wih_ref[...],
                 preferred_element_type=jnp.float32) + bl_ref[...]   # (B*T, 4H)
    zx = zx.reshape(B, T, H4)              # rows were batch-major: [b, t] <- b*T + t
    whh = whh_ref[...]

    h = jnp.zeros((B, Hh), jnp.float32)
    c = jnp.zeros((B, Hh), jnp.float32)
    for t in range(T):                     # static T, fully unrolled
        z = zx[:, t, :] + jnp.dot(h.astype(jnp.bfloat16), whh,
                                  preferred_element_type=jnp.float32)
        sg = jax.nn.sigmoid(z[:, :H3])     # ONE EUP push covers the i, f, o gates
        g = jnp.tanh(z[:, H3:])
        c = sg[:, Hh:2 * Hh] * c + sg[:, :Hh] * g
        h = sg[:, 2 * Hh:H3] * jnp.tanh(c)

    # ---- Dropout(0.3) is identity in eval; FC into a lane-dense 128-col slab ----
    o_ref[...] = (jnp.dot(h.astype(jnp.bfloat16), wfc_ref[...],
                          preferred_element_type=jnp.float32) + bfc_ref[...])


# ---------------------------------------------------------------------------
# Wrapper: layout plumbing / weight folding in plain JAX, single pallas_call
# ---------------------------------------------------------------------------
def cnn1d_lstm_forward(x, p):
    """x: (B, 3, H, W) float32, NCHW as in PyTorch. Returns (B, num_classes)."""
    B, Cin, Himg, W = x.shape
    # PyTorch MaxPool1d(2) floors odd lengths; this fused path assumes even lengths.
    assert W % 4 == 0, "W must be divisible by 4 (two MaxPool1d(2) stages)"
    C1 = p['w1'].shape[0]              # 64
    C2 = p['w2'].shape[0]              # 128
    H = p['whh'].shape[1]              # lstm hidden
    num_classes = p['wf'].shape[0]
    assert num_classes <= NC_PAD, "num_classes must fit in the 128-lane FC slab"

    # ---- layout plumbing: mean over image-H, channels-last, pad=2, im2col, bf16 ----
    x1 = jnp.transpose(x.mean(axis=2), (0, 2, 1))                  # (B, W, Cin)
    x1p = jnp.pad(x1, ((0, 0), (2, 2), (0, 0)))                    # conv1 pad=2
    L1 = W
    p1 = jnp.concatenate([x1p[:, k:k + L1, :] for k in range(K1)], axis=-1)  # (B,L1,15)
    a1 = p1.reshape(B * L1, K1 * Cin)
    a1 = jnp.pad(a1, ((0, 0), (0, KPAD - K1 * Cin))).astype(jnp.bfloat16)    # lane-dense

    # ---- fold eval BatchNorm scale into conv weights (f32 mul, THEN bf16 cast) ----
    s1 = p['g1'] / jnp.sqrt(p['rv1'] + EPS)
    w1r = jnp.transpose(p['w1'], (2, 1, 0)).reshape(K1 * Cin, C1) * s1[None, :]
    w1r = jnp.pad(w1r, ((0, KPAD - K1 * Cin), (0, 0))).astype(jnp.bfloat16)  # (128, C1)
    b1f = (s1 * (p['b1c'] - p['rm1']) + p['be1'])[None, :]                   # (1, C1)

    s2 = p['g2'] / jnp.sqrt(p['rv2'] + EPS)
    # per-tap weights: rows = cin, cols = cout, taps stacked along rows -> (K2*C1, C2)
    w2r = jnp.concatenate([p['w2'][:, :, k].T for k in range(K2)], axis=0) * s2[None, :]
    w2r = w2r.astype(jnp.bfloat16)
    b2f = (s2 * (p['b2c'] - p['rm2']) + p['be2'])[None, :]                   # (1, C2)

    # ---- LSTM: permute gate columns (i,f,g,o) -> (i,f,o,g) so sigmoids are contiguous
    def regate(m):   # m: (..., 4H) in PyTorch (i, f, g, o) column order
        return jnp.concatenate([m[..., :H], m[..., H:2 * H],
                                m[..., 3 * H:], m[..., 2 * H:3 * H]], axis=-1)

    wih_t = regate(p['wih'].T).astype(jnp.bfloat16)                # (C2, 4H)
    whh_t = regate(p['whh'].T).astype(jnp.bfloat16)                # (H, 4H)
    bl = regate((p['bih'] + p['bhh'])[None, :])                    # (1, 4H) f32

    wfc = jnp.zeros((H, NC_PAD), jnp.float32).at[:, :num_classes].set(p['wf'].T)
    wfc = wfc.astype(jnp.bfloat16)                                 # (H, 128) zero-padded
    bfc = jnp.zeros((1, NC_PAD), jnp.float32).at[0, :num_classes].set(p['bf'])

    # ---- advisory cost estimate for XLA scheduling ----
    L1h, T = L1 // 2, L1 // 4
    flops = 2 * (B * L1 * KPAD * C1 + K2 * B * L1h * C1 * C2
                 + B * T * C2 * 4 * H + T * B * H * 4 * H + B * H * NC_PAD)
    transcendentals = T * B * 5 * H
    operands = (a1, w1r, b1f, w2r, b2f, wih_t, whh_t, bl, wfc, bfc)
    bytes_accessed = (sum(int(np.prod(o.shape)) * o.dtype.itemsize for o in operands)
                      + B * NC_PAD * 4)

    vmem = pl.BlockSpec(memory_space=pltpu.MemorySpace.VMEM)
    out_pad = pl.pallas_call(
        fused_forward_kernel,
        out_shape=jax.ShapeDtypeStruct((B, NC_PAD), jnp.float32),
        in_specs=[vmem] * 10,
        out_specs=vmem,
        scratch_shapes=[pltpu.VMEM((B, L1h + 2, C1), jnp.float32)],
        cost_estimate=pl.CostEstimate(flops=flops, transcendentals=transcendentals,
                                      bytes_accessed=bytes_accessed),
    )(*operands)
    return out_pad[:, :num_classes]


# ---------------------------------------------------------------------------
# Deterministic parameter init (shapes per the PyTorch module __init__)
# ---------------------------------------------------------------------------
def init_params(key, num_classes=3, lstm_hidden=128):
    ks = jax.random.split(key, 20)

    def u(k, shape, s):
        return jax.random.uniform(k, shape, jnp.float32, -s, s)

    H = lstm_hidden
    kk = 1.0 / np.sqrt(H)
    p = {
        'w1': u(ks[0], (64, 3, 5), 0.25), 'b1c': u(ks[1], (64,), 0.25),
        'g1': (1.0 + 0.1 * jax.random.normal(ks[2], (64,))).astype(jnp.float32),
        'be1': (0.1 * jax.random.normal(ks[3], (64,))).astype(jnp.float32),
        'rm1': (0.1 * jax.random.normal(ks[4], (64,))).astype(jnp.float32),
        'rv1': jax.random.uniform(ks[5], (64,), jnp.float32, 0.5, 1.5),
        'w2': u(ks[6], (128, 64, 3), 0.07), 'b2c': u(ks[7], (128,), 0.07),
        'g2': (1.0 + 0.1 * jax.random.normal(ks[8], (128,))).astype(jnp.float32),
        'be2': (0.1 * jax.random.normal(ks[9], (128,))).astype(jnp.float32),
        'rm2': (0.1 * jax.random.normal(ks[10], (128,))).astype(jnp.float32),
        'rv2': jax.random.uniform(ks[11], (128,), jnp.float32, 0.5, 1.5),
        'wih': u(ks[12], (4 * H, 128), kk), 'whh': u(ks[13], (4 * H, H), kk),
        'bih': u(ks[14], (4 * H,), kk), 'bhh': u(ks[15], (4 * H,), kk),
        'wf': u(ks[16], (num_classes, H), kk), 'bf': u(ks[17], (num_classes,), kk),
    }
    return p


# ---------------------------------------------------------------------------
# Plain-JAX reference (same eval-mode semantics, original gate order) for validation
# ---------------------------------------------------------------------------
def reference_forward(x, p):
    xm = x.mean(axis=2)                                    # (B, 3, W)

    def conv1d(xin, w, b, pad):
        y = jax.lax.conv_general_dilated(
            xin, w, (1,), [(pad, pad)], dimension_numbers=('NCH', 'OIH', 'NCH'))
        return y + b[None, :, None]

    def bn(xin, g, be, rm, rv):
        return ((xin - rm[None, :, None]) / jnp.sqrt(rv[None, :, None] + EPS)
                * g[None, :, None] + be[None, :, None])

    def pool(xin):
        B, C, L = xin.shape
        return xin.reshape(B, C, L // 2, 2).max(axis=3)

    h = pool(jnp.maximum(bn(conv1d(xm, p['w1'], p['b1c'], 2),
                            p['g1'], p['be1'], p['rm1'], p['rv1']), 0.0))
    h = pool(jnp.maximum(bn(conv1d(h, p['w2'], p['b2c'], 1),
                            p['g2'], p['be2'], p['rm2'], p['rv2']), 0.0))
    seq = jnp.transpose(h, (0, 2, 1))                      # (B, T, 128)
    Hh = p['whh'].shape[1]
    B = x.shape[0]

    def step(carry, x_t):
        hh, cc = carry
        z = x_t @ p['wih'].T + hh @ p['whh'].T + p['bih'] + p['bhh']
        i = jax.nn.sigmoid(z[:, :Hh])
        f = jax.nn.sigmoid(z[:, Hh:2 * Hh])
        g = jnp.tanh(z[:, 2 * Hh:3 * Hh])
        o = jax.nn.sigmoid(z[:, 3 * Hh:])
        cc = f * cc + i * g
        hh = o * jnp.tanh(cc)
        return (hh, cc), None

    (hT, _), _ = jax.lax.scan(step,
                              (jnp.zeros((B, Hh), jnp.float32),
                               jnp.zeros((B, Hh), jnp.float32)),
                              jnp.transpose(seq, (1, 0, 2)))
    return hT @ p['wf'].T + p['bf']


if __name__ == "__main__":
    key = jax.random.PRNGKey(0)
    kx, kp = jax.random.split(key)
    x = jax.random.normal(kx, (2, 3, 16, 16), jnp.float32)   # (B, C=3, H, W)
    params = init_params(kp, num_classes=3, lstm_hidden=128)

    out = jax.jit(cnn1d_lstm_forward)(x, params)
    jax.block_until_ready(out)

    ref = reference_forward(x, params)
    np.testing.assert_allclose(np.asarray(out), np.asarray(ref), rtol=2e-2, atol=2e-2)
    print("KERNEL_OK")
</pallas_src>

<mosaic_0001>
module attributes {stable_mosaic.version = 11 : i64} {
  func.func @fused_forward_kernel(%arg0: memref<32x128xbf16, #tpu.memory_space<vmem>>, %arg1: memref<128x64xbf16, #tpu.memory_space<vmem>>, %arg2: memref<1x64xf32, #tpu.memory_space<vmem>>, %arg3: memref<192x128xbf16, #tpu.memory_space<vmem>>, %arg4: memref<1x128xf32, #tpu.memory_space<vmem>>, %arg5: memref<128x512xbf16, #tpu.memory_space<vmem>>, %arg6: memref<128x512xbf16, #tpu.memory_space<vmem>>, %arg7: memref<1x512xf32, #tpu.memory_space<vmem>>, %arg8: memref<128x128xbf16, #tpu.memory_space<vmem>>, %arg9: memref<1x128xf32, #tpu.memory_space<vmem>>, %arg10: memref<2x128xf32, #tpu.memory_space<vmem>>, %arg11: memref<2x10x64xf32, #tpu.memory_space<vmem>>) attributes {dimension_semantics = [], scalar_prefetch = 0 : i64, scratch_operands = 1 : i64, tpu.core_type = #tpu.core_type<tc>} {
    %c0 = arith.constant 0 : index
    %c0_0 = arith.constant 0 : index
    %0 = vector.load %arg0[%c0, %c0_0] : memref<32x128xbf16, #tpu.memory_space<vmem>>, vector<32x128xbf16>
    %c0_1 = arith.constant 0 : index
    %c0_2 = arith.constant 0 : index
    %1 = vector.load %arg1[%c0_1, %c0_2] : memref<128x64xbf16, #tpu.memory_space<vmem>>, vector<128x64xbf16>
    %cst = arith.constant dense<0.000000e+00> : vector<32x64xf32>
    %2 = tpu.matmul %0, %1, %cst {dimension_numbers = #tpu.dot_dimension_numbers<[1], [0], [0], [1], [0, 0, 1, 1], [], []>} : vector<32x128xbf16>, vector<128x64xbf16>, vector<32x64xf32> -> vector<32x64xf32>
    %c0_3 = arith.constant 0 : index
    %c0_4 = arith.constant 0 : index
    %3 = vector.load %arg2[%c0_3, %c0_4] : memref<1x64xf32, #tpu.memory_space<vmem>>, vector<1x64xf32>
    %4 = vector.broadcast %3 : vector<1x64xf32> to vector<32x64xf32>
    %5 = arith.addf %2, %4 : vector<32x64xf32>
    %cst_5 = arith.constant 0.000000e+00 : f32
    %6 = vector.broadcast %cst_5 : f32 to vector<32x64xf32>
    %7 = arith.maximumf %5, %6 : vector<32x64xf32>
    %8 = vector.shape_cast %7 : vector<32x64xf32> to vector<16x2x64xf32>
    %cst_6 = arith.constant dense<0xFF800000> : vector<16x64xf32>
    %9 = vector.multi_reduction <maximumf>, %8, %cst_6 [1] : vector<16x2x64xf32> to vector<16x64xf32>
    %cst_7 = arith.constant 0.000000e+00 : f32
    %10 = vector.broadcast %cst_7 : f32 to vector<2x10x64xf32>
    %c0_8 = arith.constant 0 : index
    %c0_9 = arith.constant 0 : index
    %c0_10 = arith.constant 0 : index
    %11 = vector.load %arg11[%c0_8, %c0_9, %c0_10] : memref<2x10x64xf32, #tpu.memory_space<vmem>>, vector<2x10x64xf32>
    tpu.vector_store %arg11[%c0_8, %c0_9, %c0_10], %10 {strides = array<i32>} : memref<2x10x64xf32, #tpu.memory_space<vmem>>, vector<2x10x64xf32>,
    %12 = vector.shape_cast %9 : vector<16x64xf32> to vector<2x8x64xf32>
    %c0_11 = arith.constant 0 : index
    %c1 = arith.constant 1 : index
    %c0_12 = arith.constant 0 : index
    %13 = vector.load %arg11[%c0_11, %c1, %c0_12] : memref<2x10x64xf32, #tpu.memory_space<vmem>>, vector<2x8x64xf32>
    tpu.vector_store %arg11[%c0_11, %c1, %c0_12], %12 {strides = array<i32>} : memref<2x10x64xf32, #tpu.memory_space<vmem>>, vector<2x8x64xf32>,
    %c0_13 = arith.constant 0 : index
    %c0_14 = arith.constant 0 : index
    %c0_15 = arith.constant 0 : index
    %14 = vector.load %arg11[%c0_13, %c0_14, %c0_15] : memref<2x10x64xf32, #tpu.memory_space<vmem>>, vector<2x10x64xf32>
    %cst_16 = arith.constant 0.000000e+00 : f32
    %15 = vector.broadcast %cst_16 : f32 to vector<16x128xf32>
    %16 = vector.extract_strided_slice %14 {offsets = [0, 0, 0], sizes = [2, 8, 64], strides = [1, 1, 1]} : vector<2x10x64xf32> to vector<2x8x64xf32>
    %17 = vector.shape_cast %16 : vector<2x8x64xf32> to vector<16x64xf32>
    %18 = arith.truncf %17 : vector<16x64xf32> to vector<16x64xbf16>
    %c0_17 = arith.constant 0 : index
    %c0_18 = arith.constant 0 : index
    %19 = vector.load %arg3[%c0_17, %c0_18] : memref<192x128xbf16, #tpu.memory_space<vmem>>, vector<64x128xbf16>
    %cst_19 = arith.constant dense<0.000000e+00> : vector<16x128xf32>
    %20 = tpu.matmul %18, %19, %cst_19 {dimension_numbers = #tpu.dot_dimension_numbers<[1], [0], [0], [1], [0, 0, 1, 1], [], []>} : vector<16x64xbf16>, vector<64x128xbf16>, vector<16x128xf32> -> vector<16x128xf32>
    %21 = arith.addf %15, %20 : vector<16x128xf32>
    %22 = vector.extract_strided_slice %14 {offsets = [0, 1, 0], sizes = [2, 8, 64], strides = [1, 1, 1]} : vector<2x10x64xf32> to vector<2x8x64xf32>
    %23 = vector.shape_cast %22 : vector<2x8x64xf32> to vector<16x64xf32>
    %24 = arith.truncf %23 : vector<16x64xf32> to vector<16x64xbf16>
    %c64 = arith.constant 64 : index
    %c0_20 = arith.constant 0 : index
    %25 = vector.load %arg3[%c64, %c0_20] : memref<192x128xbf16, #tpu.memory_space<vmem>>, vector<64x128xbf16>
    %cst_21 = arith.constant dense<0.000000e+00> : vector<16x128xf32>
    %26 = tpu.matmul %24, %25, %cst_21 {dimension_numbers = #tpu.dot_dimension_numbers<[1], [0], [0], [1], [0, 0, 1, 1], [], []>} : vector<16x64xbf16>, vector<64x128xbf16>, vector<16x128xf32> -> vector<16x128xf32>
    %27 = arith.addf %21, %26 : vector<16x128xf32>
    %28 = vector.extract_strided_slice %14 {offsets = [0, 2, 0], sizes = [2, 8, 64], strides = [1, 1, 1]} : vector<2x10x64xf32> to vector<2x8x64xf32>
    %29 = vector.shape_cast %28 : vector<2x8x64xf32> to vector<16x64xf32>
    %30 = arith.truncf %29 : vector<16x64xf32> to vector<16x64xbf16>
    %c128 = arith.constant 128 : index
    %c0_22 = arith.constant 0 : index
    %31 = vector.load %arg3[%c128, %c0_22] : memref<192x128xbf16, #tpu.memory_space<vmem>>, vector<64x128xbf16>
    %cst_23 = arith.constant dense<0.000000e+00> : vector<16x128xf32>
    %32 = tpu.matmul %30, %31, %cst_23 {dimension_numbers = #tpu.dot_dimension_numbers<[1], [0], [0], [1], [0, 0, 1, 1], [], []>} : vector<16x64xbf16>, vector<64x128xbf16>, vector<16x128xf32> -> vector<16x128xf32>
    %33 = arith.addf %27, %32 : vector<16x128xf32>
    %c0_24 = arith.constant 0 : index
    %c0_25 = arith.constant 0 : index
    %34 = vector.load %arg4[%c0_24, %c0_25] : memref<1x128xf32, #tpu.memory_space<vmem>>, vector<1x128xf32>
    %35 = vector.broadcast %34 : vector<1x128xf32> to vector<16x128xf32>
    %36 = arith.addf %33, %35 : vector<16x128xf32>
    %cst_26 = arith.constant 0.000000e+00 : f32
    %37 = vector.broadcast %cst_26 : f32 to vector<16x128xf32>
    %38 = arith.maximumf %36, %37 : vector<16x128xf32>
    %39 = vector.shape_cast %38 : vector<16x128xf32> to vector<8x2x128xf32>
    %cst_27 = arith.constant dense<0xFF800000> : vector<8x128xf32>
    %40 = vector.multi_reduction <maximumf>, %39, %cst_27 [1] : vector<8x2x128xf32> to vector<8x128xf32>
    %41 = arith.truncf %40 : vector<8x128xf32> to vector<8x128xbf16>
    %c0_28 = arith.constant 0 : index
    %c0_29 = arith.constant 0 : index
    %42 = vector.load %arg5[%c0_28, %c0_29] : memref<128x512xbf16, #tpu.memory_space<vmem>>, vector<128x512xbf16>
    %cst_30 = arith.constant dense<0.000000e+00> : vector<8x512xf32>
    %43 = tpu.matmul %41, %42, %cst_30 {dimension_numbers = #tpu.dot_dimension_numbers<[1], [0], [0], [1], [0, 0, 1, 1], [], []>} : vector<8x128xbf16>, vector<128x512xbf16>, vector<8x512xf32> -> vector<8x512xf32>
    %c0_31 = arith.constant 0 : index
    %c0_32 = arith.constant 0 : index
    %44 = vector.load %arg7[%c0_31, %c0_32] : memref<1x512xf32, #tpu.memory_space<vmem>>, vector<1x512xf32>
    %45 = vector.broadcast %44 : vector<1x512xf32> to vector<8x512xf32>
    %46 = arith.addf %43, %45 : vector<8x512xf32>
    %47 = vector.shape_cast %46 : vector<8x512xf32> to vector<2x4x512xf32>
    %c0_33 = arith.constant 0 : index
    %c0_34 = arith.constant 0 : index
    %48 = vector.load %arg6[%c0_33, %c0_34] : memref<128x512xbf16, #tpu.memory_space<vmem>>, vector<128x512xbf16>
    %cst_35 = arith.constant 0.000000e+00 : f32
    %49 = vector.broadcast %cst_35 : f32 to vector<2x128xf32>
    %cst_36 = arith.constant 0.000000e+00 : f32
    %50 = vector.broadcast %cst_36 : f32 to vector<2x128xf32>
    %51 = vector.extract_strided_slice %47 {offsets = [0, 0, 0], sizes = [2, 1, 512], strides = [1, 1, 1]} : vector<2x4x512xf32> to vector<2x1x512xf32>
    %52 = vector.shape_cast %51 : vector<2x1x512xf32> to vector<2x512xf32>
    %53 = arith.truncf %49 : vector<2x128xf32> to vector<2x128xbf16>
    %cst_37 = arith.constant dense<0.000000e+00> : vector<2x512xf32>
    %54 = tpu.matmul %53, %48, %cst_37 {dimension_numbers = #tpu.dot_dimension_numbers<[1], [0], [0], [1], [0, 0, 1, 1], [], []>} : vector<2x128xbf16>, vector<128x512xbf16>, vector<2x512xf32> -> vector<2x512xf32>
    %55 = arith.addf %52, %54 : vector<2x512xf32>
    %56 = vector.extract_strided_slice %55 {offsets = [0, 0], sizes = [2, 384], strides = [1, 1]} : vector<2x512xf32> to vector<2x384xf32>
    %57 = arith.negf %56 : vector<2x384xf32>
    %58 = math.exp %57 : vector<2x384xf32>
    %cst_38 = arith.constant 1.000000e+00 : f32
    %59 = vector.broadcast %cst_38 : f32 to vector<2x384xf32>
    %60 = arith.addf %59, %58 : vector<2x384xf32>
    %61 = arith.divf %59, %60 : vector<2x384xf32>
    %62 = vector.extract_strided_slice %55 {offsets = [0, 384], sizes = [2, 128], strides = [1, 1]} : vector<2x512xf32> to vector<2x128xf32>
    %63 = math.tanh %62 : vector<2x128xf32>
    %64 = vector.extract_strided_slice %61 {offsets = [0, 128], sizes = [2, 128], strides = [1, 1]} : vector<2x384xf32> to vector<2x128xf32>
    %65 = arith.mulf %64, %50 : vector<2x128xf32>
    %66 = vector.extract_strided_slice %61 {offsets = [0, 0], sizes = [2, 128], strides = [1, 1]} : vector<2x384xf32> to vector<2x128xf32>
    %67 = arith.mulf %66, %63 : vector<2x128xf32>
    %68 = arith.addf %65, %67 : vector<2x128xf32>
    %69 = vector.extract_strided_slice %61 {offsets = [0, 256], sizes = [2, 128], strides = [1, 1]} : vector<2x384xf32> to vector<2x128xf32>
    %70 = math.tanh %68 : vector<2x128xf32>
    %71 = arith.mulf %69, %70 : vector<2x128xf32>
    %72 = vector.extract_strided_slice %47 {offsets = [0, 1, 0], sizes = [2, 1, 512], strides = [1, 1, 1]} : vector<2x4x512xf32> to vector<2x1x512xf32>
    %73 = vector.shape_cast %72 : vector<2x1x512xf32> to vector<2x512xf32>
    %74 = arith.truncf %71 : vector<2x128xf32> to vector<2x128xbf16>
    %cst_39 = arith.constant dense<0.000000e+00> : vector<2x512xf32>
    %75 = tpu.matmul %74, %48, %cst_39 {dimension_numbers = #tpu.dot_dimension_numbers<[1], [0], [0], [1], [0, 0, 1, 1], [], []>} : vector<2x128xbf16>, vector<128x512xbf16>, vector<2x512xf32> -> vector<2x512xf32>
    %76 = arith.addf %73, %75 : vector<2x512xf32>
    %77 = vector.extract_strided_slice %76 {offsets = [0, 0], sizes = [2, 384], strides = [1, 1]} : vector<2x512xf32> to vector<2x384xf32>
    %78 = arith.negf %77 : vector<2x384xf32>
    %79 = math.exp %78 : vector<2x384xf32>
    %cst_40 = arith.constant 1.000000e+00 : f32
    %80 = vector.broadcast %cst_40 : f32 to vector<2x384xf32>
    %81 = arith.addf %80, %79 : vector<2x384xf32>
    %82 = arith.divf %80, %81 : vector<2x384xf32>
    %83 = vector.extract_strided_slice %76 {offsets = [0, 384], sizes = [2, 128], strides = [1, 1]} : vector<2x512xf32> to vector<2x128xf32>
    %84 = math.tanh %83 : vector<2x128xf32>
    %85 = vector.extract_strided_slice %82 {offsets = [0, 128], sizes = [2, 128], strides = [1, 1]} : vector<2x384xf32> to vector<2x128xf32>
    %86 = arith.mulf %85, %68 : vector<2x128xf32>
    %87 = vector.extract_strided_slice %82 {offsets = [0, 0], sizes = [2, 128], strides = [1, 1]} : vector<2x384xf32> to vector<2x128xf32>
    %88 = arith.mulf %87, %84 : vector<2x128xf32>
    %89 = arith.addf %86, %88 : vector<2x128xf32>
    %90 = vector.extract_strided_slice %82 {offsets = [0, 256], sizes = [2, 128], strides = [1, 1]} : vector<2x384xf32> to vector<2x128xf32>
    %91 = math.tanh %89 : vector<2x128xf32>
    %92 = arith.mulf %90, %91 : vector<2x128xf32>
    %93 = vector.extract_strided_slice %47 {offsets = [0, 2, 0], sizes = [2, 1, 512], strides = [1, 1, 1]} : vector<2x4x512xf32> to vector<2x1x512xf32>
    %94 = vector.shape_cast %93 : vector<2x1x512xf32> to vector<2x512xf32>
    %95 = arith.truncf %92 : vector<2x128xf32> to vector<2x128xbf16>
    %cst_41 = arith.constant dense<0.000000e+00> : vector<2x512xf32>
    %96 = tpu.matmul %95, %48, %cst_41 {dimension_numbers = #tpu.dot_dimension_numbers<[1], [0], [0], [1], [0, 0, 1, 1], [], []>} : vector<2x128xbf16>, vector<128x512xbf16>, vector<2x512xf32> -> vector<2x512xf32>
    %97 = arith.addf %94, %96 : vector<2x512xf32>
    %98 = vector.extract_strided_slice %97 {offsets = [0, 0], sizes = [2, 384], strides = [1, 1]} : vector<2x512xf32> to vector<2x384xf32>
    %99 = arith.negf %98 : vector<2x384xf32>
    %100 = math.exp %99 : vector<2x384xf32>
    %cst_42 = arith.constant 1.000000e+00 : f32
    %101 = vector.broadcast %cst_42 : f32 to vector<2x384xf32>
    %102 = arith.addf %101, %100 : vector<2x384xf32>
    %103 = arith.divf %101, %102 : vector<2x384xf32>
    %104 = vector.extract_strided_slice %97 {offsets = [0, 384], sizes = [2, 128], strides = [1, 1]} : vector<2x512xf32> to vector<2x128xf32>
    %105 = math.tanh %104 : vector<2x128xf32>
    %106 = vector.extract_strided_slice %103 {offsets = [0, 128], sizes = [2, 128], strides = [1, 1]} : vector<2x384xf32> to vector<2x128xf32>
    %107 = arith.mulf %106, %89 : vector<2x128xf32>
    %108 = vector.extract_strided_slice %103 {offsets = [0, 0], sizes = [2, 128], strides = [1, 1]} : vector<2x384xf32> to vector<2x128xf32>
    %109 = arith.mulf %108, %105 : vector<2x128xf32>
    %110 = arith.addf %107, %109 : vector<2x128xf32>
    %111 = vector.extract_strided_slice %103 {offsets = [0, 256], sizes = [2, 128], strides = [1, 1]} : vector<2x384xf32> to vector<2x128xf32>
    %112 = math.tanh %110 : vector<2x128xf32>
    %113 = arith.mulf %111, %112 : vector<2x128xf32>
    %114 = vector.extract_strided_slice %47 {offsets = [0, 3, 0], sizes = [2, 1, 512], strides = [1, 1, 1]} : vector<2x4x512xf32> to vector<2x1x512xf32>
    %115 = vector.shape_cast %114 : vector<2x1x512xf32> to vector<2x512xf32>
    %116 = arith.truncf %113 : vector<2x128xf32> to vector<2x128xbf16>
    %cst_43 = arith.constant dense<0.000000e+00> : vector<2x512xf32>
    %117 = tpu.matmul %116, %48, %cst_43 {dimension_numbers = #tpu.dot_dimension_numbers<[1], [0], [0], [1], [0, 0, 1, 1], [], []>} : vector<2x128xbf16>, vector<128x512xbf16>, vector<2x512xf32> -> vector<2x512xf32>
    %118 = arith.addf %115, %117 : vector<2x512xf32>
    %119 = vector.extract_strided_slice %118 {offsets = [0, 0], sizes = [2, 384], strides = [1, 1]} : vector<2x512xf32> to vector<2x384xf32>
    %120 = arith.negf %119 : vector<2x384xf32>
    %121 = math.exp %120 : vector<2x384xf32>
    %cst_44 = arith.constant 1.000000e+00 : f32
    %122 = vector.broadcast %cst_44 : f32 to vector<2x384xf32>
    %123 = arith.addf %122, %121 : vector<2x384xf32>
    %124 = arith.divf %122, %123 : vector<2x384xf32>
    %125 = vector.extract_strided_slice %118 {offsets = [0, 384], sizes = [2, 128], strides = [1, 1]} : vector<2x512xf32> to vector<2x128xf32>
    %126 = math.tanh %125 : vector<2x128xf32>
    %127 = vector.extract_strided_slice %124 {offsets = [0, 128], sizes = [2, 128], strides = [1, 1]} : vector<2x384xf32> to vector<2x128xf32>
    %128 = arith.mulf %127, %110 : vector<2x128xf32>
    %129 = vector.extract_strided_slice %124 {offsets = [0, 0], sizes = [2, 128], strides = [1, 1]} : vector<2x384xf32> to vector<2x128xf32>
    %130 = arith.mulf %129, %126 : vector<2x128xf32>
    %131 = arith.addf %128, %130 : vector<2x128xf32>
    %132 = vector.extract_strided_slice %124 {offsets = [0, 256], sizes = [2, 128], strides = [1, 1]} : vector<2x384xf32> to vector<2x128xf32>
    %133 = math.tanh %131 : vector<2x128xf32>
    %134 = arith.mulf %132, %133 : vector<2x128xf32>
    %135 = arith.truncf %134 : vector<2x128xf32> to vector<2x128xbf16>
    %c0_45 = arith.constant 0 : index
    %c0_46 = arith.constant 0 : index
    %136 = vector.load %arg8[%c0_45, %c0_46] : memref<128x128xbf16, #tpu.memory_space<vmem>>, vector<128x128xbf16>
    %cst_47 = arith.constant dense<0.000000e+00> : vector<2x128xf32>
    %137 = tpu.matmul %135, %136, %cst_47 {dimension_numbers = #tpu.dot_dimension_numbers<[1], [0], [0], [1], [0, 0, 1, 1], [], []>} : vector<2x128xbf16>, vector<128x128xbf16>, vector<2x128xf32> -> vector<2x128xf32>
    %c0_48 = arith.constant 0 : index
    %c0_49 = arith.constant 0 : index
    %138 = vector.load %arg9[%c0_48, %c0_49] : memref<1x128xf32, #tpu.memory_space<vmem>>, vector<1x128xf32>
    %139 = vector.broadcast %138 : vector<1x128xf32> to vector<2x128xf32>
    %140 = arith.addf %137, %139 : vector<2x128xf32>
    %c0_50 = arith.constant 0 : index
    %c0_51 = arith.constant 0 : index
    %141 = vector.load %arg10[%c0_50, %c0_51] : memref<2x128xf32, #tpu.memory_space<vmem>>, vector<2x128xf32>
    tpu.vector_store %arg10[%c0_50, %c0_51], %140 {strides = array<i32>} : memref<2x128xf32, #tpu.memory_space<vmem>>, vector<2x128xf32>,
    return
  }
}

</mosaic_0001>

<llo_original>
// kernel: cnn1d_lstm_forward.1
$region0: #{cnn1d_lstm_forward.1}
  #allocation0 [shape = 'u32[]', space=smem, size = 0x4, offset = 0x4, fixed_abs, tag = 'smem constant byte address 0x4 - core index']
  #allocation1 [shape = 'u32[72,128]{1,0:T(1,128)}', space=vmem, size = 0x9000, scoped, tag = 'internal scratch']
  #allocation2 [shape = 'f32[2,10,64]{2,1,0:T(8,128)}', space=vmem, size = 0x4000, scoped, tag = 'scratch operand']
  %s0 = inlined_call_operand.vmem [shape: bf16[32,128], index: 0, kind: input, shape index: {}]
  %s1 = inlined_call_operand.vmem [shape: bf16[128,64], index: 1, kind: input, shape index: {}]
  %s2 = inlined_call_operand.vmem [shape: f32[1,64], index: 2, kind: input, shape index: {}]
  %s3 = inlined_call_operand.vmem [shape: bf16[192,128], index: 3, kind: input, shape index: {}]
  %s4 = inlined_call_operand.vmem [shape: f32[1,128], index: 4, kind: input, shape index: {}]
  %s5 = inlined_call_operand.vmem [shape: bf16[128,512], index: 5, kind: input, shape index: {}]
  %s6 = inlined_call_operand.vmem [shape: bf16[128,512], index: 6, kind: input, shape index: {}]
  %s7 = inlined_call_operand.vmem [shape: f32[1,512], index: 7, kind: input, shape index: {}]
  %s8 = inlined_call_operand.vmem [shape: bf16[128,128], index: 8, kind: input, shape index: {}]
  %s9 = inlined_call_operand.vmem [shape: f32[1,128], index: 9, kind: input, shape index: {}]
  %s10 = inlined_call_operand.hbm [shape: f32[2,128], index: 10, kind: output, shape index: {}]
  %s11 = sld [smem:[#allocation0]]
  $region50: #{cnn1d_lstm_forward.1} parent=0
    _
  %s13 = ssub.s32 1, %s11
  %s14 = scalar_select 0, %s13, %s11
  $region1: #{cnn1d_lstm_forward.1} parent=0
    #allocation3 [shape = 'u8[1024]{0}', space=vmem, size = 0x400, scoped, tag = 'output window, operand 0, single buffered']
    #allocation4 [shape = 's32[1]{0}', space=sflag, size = 0x4, scoped, tag = 'scoped memory for cnn1d_lstm_forward.1']
    %15 = vsyncpa [#allocation4], 0
    // Predicated region
    $region2: #{cnn1d_lstm_forward.1} parent=1 // pred_check
      _
    $region3: #{cnn1d_lstm_forward.1} parent=1 // pred_check_branch
      %17 = sbr.rel (0) target = $region5
    $region4: #{cnn1d_lstm_forward.1} parent=1 // pred_region
      _
    $region5: #{cnn1d_lstm_forward.1} parent=1 // pred_fallthru
      _
    // Predicated region
    $region6: #{cnn1d_lstm_forward.1} parent=1 // pred_check
      _
    $region7: #{cnn1d_lstm_forward.1} parent=1 // pred_check_branch
      %19 = sbr.rel (0) target = $region9
    $region8: #{cnn1d_lstm_forward.1} parent=1 // pred_region
      _
    $region9: #{cnn1d_lstm_forward.1} parent=1 // pred_fallthru
      _
    // Predicated region
    $region10: #{cnn1d_lstm_forward.1} parent=1 // pred_check
      _
    $region11: #{cnn1d_lstm_forward.1} parent=1 // pred_check_branch
      %21 = sbr.rel (0) target = $region13
    $region12: #{cnn1d_lstm_forward.1} parent=1 // pred_region
      _
    $region13: #{cnn1d_lstm_forward.1} parent=1 // pred_fallthru
      _
    // Predicated region
    $region14: #{cnn1d_lstm_forward.1} parent=1 // pred_check
      _
    $region15: #{cnn1d_lstm_forward.1} parent=1 // pred_check_branch
      %23 = sbr.rel (0) target = $region17
    $region16: #{cnn1d_lstm_forward.1} parent=1 // pred_region
      _
    $region17: #{cnn1d_lstm_forward.1} parent=1 // pred_fallthru
      _
    // Predicated region
    $region18: #{cnn1d_lstm_forward.1} parent=1 // pred_check
      _
    $region19: #{cnn1d_lstm_forward.1} parent=1 // pred_check_branch
      %25 = sbr.rel (0) target = $region21
    $region20: #{cnn1d_lstm_forward.1} parent=1 // pred_region
      _
    $region21: #{cnn1d_lstm_forward.1} parent=1 // pred_fallthru
      _
    // Predicated region
    $region22: #{cnn1d_lstm_forward.1} parent=1 // pred_check
      _
    $region23: #{cnn1d_lstm_forward.1} parent=1 // pred_check_branch
      %27 = sbr.rel (0) target = $region25
    $region24: #{cnn1d_lstm_forward.1} parent=1 // pred_region
      _
    $region25: #{cnn1d_lstm_forward.1} parent=1 // pred_fallthru
      _
    // Predicated region
    $region26: #{cnn1d_lstm_forward.1} parent=1 // pred_check
      _
    $region27: #{cnn1d_lstm_forward.1} parent=1 // pred_check_branch
      %29 = sbr.rel (0) target = $region29
    $region28: #{cnn1d_lstm_forward.1} parent=1 // pred_region
      _
    $region29: #{cnn1d_lstm_forward.1} parent=1 // pred_fallthru
      _
    // Predicated region
    $region30: #{cnn1d_lstm_forward.1} parent=1 // pred_check
      _
    $region31: #{cnn1d_lstm_forward.1} parent=1 // pred_check_branch
      %31 = sbr.rel (0) target = $region33
    $region32: #{cnn1d_lstm_forward.1} parent=1 // pred_region
      _
    $region33: #{cnn1d_lstm_forward.1} parent=1 // pred_fallthru
      _
    // Predicated region
    $region34: #{cnn1d_lstm_forward.1} parent=1 // pred_check
      _
    $region35: #{cnn1d_lstm_forward.1} parent=1 // pred_check_branch
      %33 = sbr.rel (0) target = $region37
    $region36: #{cnn1d_lstm_forward.1} parent=1 // pred_region
      _
    $region37: #{cnn1d_lstm_forward.1} parent=1 // pred_fallthru
      _
    // Predicated region
    $region38: #{cnn1d_lstm_forward.1} parent=1 // pred_check
      _
    $region39: #{cnn1d_lstm_forward.1} parent=1 // pred_check_branch
      %35 = sbr.rel (0) target = $region41
    $region40: #{cnn1d_lstm_forward.1} parent=1 // pred_region
      _
    $region41: #{cnn1d_lstm_forward.1} parent=1 // pred_fallthru
      _
    %v37 = vld [vmem:[%s0] sm:$0xf]
    %v38 = vld [vmem:[%s0 + $0x4] sm:$0xf]
    %v39 = vld [vmem:[%s0 + $0x8] sm:$0xf]
    %v40 = vld [vmem:[%s0 + $0xc] sm:$0xf]
    %v41 = vld [vmem:[%s1] sm:$0xf]
    %v42 = vld [vmem:[%s1 + $0x4] sm:$0xf]
    %v43 = vld [vmem:[%s1 + $0x8] sm:$0xf]
    %v44 = vld [vmem:[%s1 + $0xc] sm:$0xf]
    %v45 = vld [vmem:[%s1 + $0x10] sm:$0xf]
    %v46 = vld [vmem:[%s1 + $0x14] sm:$0xf]
    %v47 = vld [vmem:[%s1 + $0x18] sm:$0xf]
    %v48 = vld [vmem:[%s1 + $0x1c] sm:$0xf]
    %v49 = vld [vmem:[%s1 + $0x20] sm:$0xf]
    %v50 = vld [vmem:[%s1 + $0x24] sm:$0xf]
    %v51 = vld [vmem:[%s1 + $0x28] sm:$0xf]
    %v52 = vld [vmem:[%s1 + $0x2c] sm:$0xf]
    %v53 = vld [vmem:[%s1 + $0x30] sm:$0xf]
    %v54 = vld [vmem:[%s1 + $0x34] sm:$0xf]
    %v55 = vld [vmem:[%s1 + $0x38] sm:$0xf]
    %v56 = vld [vmem:[%s1 + $0x3c] sm:$0xf]
    %v57 = vld [vmem:[%s2] sm:$0x1]
    %v59 = vperm.slane %v57, 0
    %v65 = vunpack.c.l.b16 %v37
    %v66 = vunpack.c.l.b16 %v38
    %v67 = vunpack.c.l.b16 %v39
    %v68 = vunpack.c.l.b16 %v40
    %v69 = vpack.c.b16 %v66, %v65
    %v70 = vpack.c.b16 %v68, %v67
    %v89 = vunpack.c.l.b16 %v41
    %v90 = vunpack.c.l.b16 %v42
    %v91 = vunpack.c.l.b16 %v43
    %v92 = vunpack.c.l.b16 %v44
    %v93 = vunpack.c.l.b16 %v45
    %v94 = vunpack.c.l.b16 %v46
    %v95 = vunpack.c.l.b16 %v47
    %v96 = vunpack.c.l.b16 %v48
    %v97 = vunpack.c.l.b16 %v49
    %v98 = vunpack.c.l.b16 %v50
    %v99 = vunpack.c.l.b16 %v51
    %v100 = vunpack.c.l.b16 %v52
    %v101 = vunpack.c.l.b16 %v53
    %v102 = vunpack.c.l.b16 %v54
    %v103 = vunpack.c.l.b16 %v55
    %v104 = vunpack.c.l.b16 %v56
    %v105 = vpack.c.b16 %v90, %v89
    %v106 = vpack.c.b16 %v92, %v91
    %v107 = vpack.c.b16 %v94, %v93
    %v108 = vpack.c.b16 %v96, %v95
    %v109 = vpack.c.b16 %v98, %v97
    %v110 = vpack.c.b16 %v100, %v99
    %v111 = vpack.c.b16 %v102, %v101
    %v112 = vpack.c.b16 %v104, %v103
    %121 = vmatpush.bf16.msra.mxu0 %v112
    %122 = vmatpush.bf16.msra.mxu0 %v111
    %123 = vmatpush.bf16.msra.mxu0 %v110
    %124 = vmatpush.bf16.msra.mxu0 %v109
    %125 = vmatpush.bf16.msra.mxu0 %v108
    %126 = vmatpush.bf16.msra.mxu0 %v107
    %127 = vmatpush.bf16.msra.mxu0 %v106
    %128 = vmatpush.bf16.msra.mxu0 %v105
    %129 = vmatmul.bf16.gmra.mxu0 %v69
    %v130 = vpop.f32.mrf.mxu0
    %v131 = vadd.f32 %v59, %v130
    %v132 = vpop.f32.mrf.mxu0
    %v133 = vadd.f32 %v59, %v132
    %134 = vmatmul.bf16.gmra.mxu0 %v70
    %v135 = vpop.f32.mrf.mxu0
    %v136 = vadd.f32 %v59, %v135
    %v137 = vpop.f32.mrf.mxu0
    %v138 = vadd.f32 %v59, %v137
    %139 = vdwg.mxu0
    %v140 = vmax.f32 %v131, 0.0
    %v141 = vmax.f32 %v133, 0.0
    %v142 = vmax.f32 %v136, 0.0
    %v143 = vmax.f32 %v138, 0.0
    %v148 = vrot.slane %v140, 2
    %v149 = vrot.slane %v140, 4
    %v150 = vrot.slane %v140, 6
    %v151 = vrot.slane %v141, 2
    %v152 = vrot.slane %v141, 4
    %v153 = vrot.slane %v141, 6
    %v154 = vrot.slane %v142, 2
    %v155 = vrot.slane %v142, 4
    %v156 = vrot.slane %v142, 6
    %v157 = vrot.slane %v143, 2
    %v158 = vrot.slane %v143, 4
    %v159 = vrot.slane %v143, 6
    %vm172 = vcmask 517120
    %v173 = vsel %vm172, %v140, -inf
    %v174 = vrot.slane %v173, 4
    %v175 = vmax.f32 %v173, %v174
    %v176 = vrot.slane %v175, 2
    %v177 = vmax.f32 %v175, %v176
    %v178 = vrot.slane %v177, 1
    %v179 = vmax.f32 %v177, %v178
    %v180 = vsel %vm172, %v148, -inf
    %v181 = vrot.slane %v180, 4
    %v182 = vmax.f32 %v180, %v181
    %v183 = vrot.slane %v182, 2
    %v184 = vmax.f32 %v182, %v183
    %v185 = vrot.slane %v184, 1
    %v186 = vmax.f32 %v184, %v185
    %v187 = vsel %vm172, %v149, -inf
    %v188 = vrot.slane %v187, 4
    %v189 = vmax.f32 %v187, %v188
    %v190 = vrot.slane %v189, 2
    %v191 = vmax.f32 %v189, %v190
    %v192 = vrot.slane %v191, 1
    %v193 = vmax.f32 %v191, %v192
    %v194 = vsel %vm172, %v150, -inf
    %v195 = vrot.slane %v194, 4
    %v196 = vmax.f32 %v194, %v195
    %v197 = vrot.slane %v196, 2
    %v198 = vmax.f32 %v196, %v197
    %v199 = vrot.slane %v198, 1
    %v200 = vmax.f32 %v198, %v199
    %v201 = vsel %vm172, %v141, -inf
    %v202 = vrot.slane %v201, 4
    %v203 = vmax.f32 %v201, %v202
    %v204 = vrot.slane %v203, 2
    %v205 = vmax.f32 %v203, %v204
    %v206 = vrot.slane %v205, 1
    %v207 = vmax.f32 %v205, %v206
    %v208 = vsel %vm172, %v151, -inf
    %v209 = vrot.slane %v208, 4
    %v210 = vmax.f32 %v208, %v209
    %v211 = vrot.slane %v210, 2
    %v212 = vmax.f32 %v210, %v211
    %v213 = vrot.slane %v212, 1
    %v214 = vmax.f32 %v212, %v213
    %v215 = vsel %vm172, %v152, -inf
    %v216 = vrot.slane %v215, 4
    %v217 = vmax.f32 %v215, %v216
    %v218 = vrot.slane %v217, 2
    %v219 = vmax.f32 %v217, %v218
    %v220 = vrot.slane %v219, 1
    %v221 = vmax.f32 %v219, %v220
    %v222 = vsel %vm172, %v153, -inf
    %v223 = vrot.slane %v222, 4
    %v224 = vmax.f32 %v222, %v223
    %v225 = vrot.slane %v224, 2
    %v226 = vmax.f32 %v224, %v225
    %v227 = vrot.slane %v226, 1
    %v228 = vmax.f32 %v226, %v227
    %v229 = vsel %vm172, %v142, -inf
    %v230 = vrot.slane %v229, 4
    %v231 = vmax.f32 %v229, %v230
    %v232 = vrot.slane %v231, 2
    %v233 = vmax.f32 %v231, %v232
    %v234 = vrot.slane %v233, 1
    %v235 = vmax.f32 %v233, %v234
    %v236 = vsel %vm172, %v154, -inf
    %v237 = vrot.slane %v236, 4
    %v238 = vmax.f32 %v236, %v237
    %v239 = vrot.slane %v238, 2
    %v240 = vmax.f32 %v238, %v239
    %v241 = vrot.slane %v240, 1
    %v242 = vmax.f32 %v240, %v241
    %v243 = vsel %vm172, %v155, -inf
    %v244 = vrot.slane %v243, 4
    %v245 = vmax.f32 %v243, %v244
    %v246 = vrot.slane %v245, 2
    %v247 = vmax.f32 %v245, %v246
    %v248 = vrot.slane %v247, 1
    %v249 = vmax.f32 %v247, %v248
    %v250 = vsel %vm172, %v156, -inf
    %v251 = vrot.slane %v250, 4
    %v252 = vmax.f32 %v250, %v251
    %v253 = vrot.slane %v252, 2
    %v254 = vmax.f32 %v252, %v253
    %v255 = vrot.slane %v254, 1
    %v256 = vmax.f32 %v254, %v255
    %v257 = vsel %vm172, %v143, -inf
    %v258 = vrot.slane %v257, 4
    %v259 = vmax.f32 %v257, %v258
    %v260 = vrot.slane %v259, 2
    %v261 = vmax.f32 %v259, %v260
    %v262 = vrot.slane %v261, 1
    %v263 = vmax.f32 %v261, %v262
    %v264 = vsel %vm172, %v157, -inf
    %v265 = vrot.slane %v264, 4
    %v266 = vmax.f32 %v264, %v265
    %v267 = vrot.slane %v266, 2
    %v268 = vmax.f32 %v266, %v267
    %v269 = vrot.slane %v268, 1
    %v270 = vmax.f32 %v268, %v269
    %v271 = vsel %vm172, %v158, -inf
    %v272 = vrot.slane %v271, 4
    %v273 = vmax.f32 %v271, %v272
    %v274 = vrot.slane %v273, 2
    %v275 = vmax.f32 %v273, %v274
    %v276 = vrot.slane %v275, 1
    %v277 = vmax.f32 %v275, %v276
    %v278 = vsel %vm172, %v159, -inf
    %v279 = vrot.slane %v278, 4
    %v280 = vmax.f32 %v278, %v279
    %v281 = vrot.slane %v280, 2
    %v282 = vmax.f32 %v280, %v281
    %v283 = vrot.slane %v282, 1
    %v284 = vmax.f32 %v282, %v283
    %vm285 = vcmask 523264
    %286 = vst.msk [vmem:[#allocation2] sm:$0xff] %vm285, 0.0
    %287 = vst.msk [vmem:[#allocation2 + $0x8] sm:$0x3] %vm172, 0.0
    %288 = vst.msk [vmem:[#allocation2 + $0x10] sm:$0xff] %vm285, 0.0
    %289 = vst.msk [vmem:[#allocation2 + $0x18] sm:$0x3] %vm172, 0.0
    %vm306 = vcmask 1041409
    %v307 = vsel %vm306, %v186, %v179
    %vm308 = vcmask 1042434
    %v309 = vsel %vm308, %v193, %v307
    %vm310 = vcmask 1043459
    %v311 = vsel %vm310, %v200, %v309
    %vm312 = vcmask 1044484
    %v313 = vsel %vm312, %v207, %v311
    %vm314 = vcmask 1045509
    %v315 = vsel %vm314, %v214, %v313
    %vm316 = vcmask 1046534
    %v317 = vsel %vm316, %v221, %v315
    %vm318 = vcmask 1047559
    %v319 = vsel %vm318, %v228, %v317
    %v320 = vsel %vm306, %v242, %v235
    %v321 = vsel %vm308, %v249, %v320
    %v322 = vsel %vm310, %v256, %v321
    %v323 = vsel %vm312, %v263, %v322
    %v324 = vsel %vm314, %v270, %v323
    %v325 = vsel %vm316, %v277, %v324
    %v326 = vsel %vm318, %v284, %v325
    %329 = vst.msk [vmem:[#allocation2 + $0x1] sm:$0xff] %vm285, %v319
    %330 = vst.msk [vmem:[#allocation2 + $0x11] sm:$0xff] %vm285, %v326
    %v331 = vld [vmem:[#allocation2] sm:$0xff]
    %v332 = vld [vmem:[#allocation2 + $0x8] sm:$0x3]
    %v333 = vld [vmem:[#allocation2 + $0x10] sm:$0xff]
    %v334 = vld [vmem:[#allocation2 + $0x18] sm:$0x3]
    %v335 = vpack.c.bf16 %v333, %v331
    %v336 = vld [vmem:[%s3] sm:$0xf]
    %v337 = vld [vmem:[%s3 + $0x4] sm:$0xf]
    %v338 = vld [vmem:[%s3 + $0x8] sm:$0xf]
    %v339 = vld [vmem:[%s3 + $0xc] sm:$0xf]
    %v340 = vld [vmem:[%s3 + $0x10] sm:$0xf]
    %v341 = vld [vmem:[%s3 + $0x14] sm:$0xf]
    %v342 = vld [vmem:[%s3 + $0x18] sm:$0xf]
    %v343 = vld [vmem:[%s3 + $0x1c] sm:$0xf]
    %vm348 = vcmask 1046528
    %v349 = vrot.slane %v331, 1
    %v350 = vrot.slane %v332, 1
    %v351 = vsel %vm348, %v349, %v350
    %v352 = vrot.slane %v333, 1
    %v353 = vrot.slane %v334, 1
    %v354 = vsel %vm348, %v352, %v353
    %v357 = vpack.c.bf16 %v354, %v351
    %v358 = vld [vmem:[%s3 + $0x20] sm:$0xf]
    %v359 = vld [vmem:[%s3 + $0x24] sm:$0xf]
    %v360 = vld [vmem:[%s3 + $0x28] sm:$0xf]
    %v361 = vld [vmem:[%s3 + $0x2c] sm:$0xf]
    %v362 = vld [vmem:[%s3 + $0x30] sm:$0xf]
    %v363 = vld [vmem:[%s3 + $0x34] sm:$0xf]
    %v364 = vld [vmem:[%s3 + $0x38] sm:$0xf]
    %v365 = vld [vmem:[%s3 + $0x3c] sm:$0xf]
    %v374 = vunpack.c.l.b16 %v358
    %v375 = vunpack.c.l.b16 %v359
    %v376 = vunpack.c.l.b16 %v360
    %v377 = vunpack.c.l.b16 %v361
    %v378 = vunpack.c.l.b16 %v362
    %v379 = vunpack.c.l.b16 %v363
    %v380 = vunpack.c.l.b16 %v364
    %v381 = vunpack.c.l.b16 %v365
    %v382 = vpack.c.b16 %v375, %v374
    %v383 = vpack.c.b16 %v377, %v376
    %v384 = vpack.c.b16 %v379, %v378
    %v385 = vpack.c.b16 %v381, %v380
    %v391 = vsel %vm285, %v357, 0
    %393 = vmatpush.bf16.msra.mxu0 0
    %394 = vmatpush.bf16.msra.mxu0 0
    %395 = vmatpush.bf16.msra.mxu0 0
    %396 = vmatpush.bf16.msra.mxu0 0
    %397 = vmatpush.bf16.msra.mxu0 %v385
    %398 = vmatpush.bf16.msra.mxu0 %v384
    %399 = vmatpush.bf16.msra.mxu0 %v383
    %400 = vmatpush.bf16.msra.mxu0 %v382
    %401 = vmatmul.bf16.gmra.mxu0 %v391
    %v402 = vpop.f32.mrf.mxu0
    %v403 = vadd.f32 0.0, %v402
    %v404 = vpop.f32.mrf.mxu0
    %v405 = vadd.f32 0.0, %v404
    %406 = vdwg.mxu0
    %v415 = vunpack.c.l.b16 %v336
    %v416 = vunpack.c.l.b16 %v337
    %v417 = vunpack.c.l.b16 %v338
    %v418 = vunpack.c.l.b16 %v339
    %v419 = vunpack.c.l.b16 %v340
    %v420 = vunpack.c.l.b16 %v341
    %v421 = vunpack.c.l.b16 %v342
    %v422 = vunpack.c.l.b16 %v343
    %v423 = vpack.c.b16 %v416, %v415
    %v424 = vpack.c.b16 %v418, %v417
    %v425 = vpack.c.b16 %v420, %v419
    %v426 = vpack.c.b16 %v422, %v421
    %v432 = vsel %vm285, %v335, 0
    %434 = vmatpush.bf16.msra.mxu0 0
    %435 = vmatpush.bf16.msra.mxu0 0
    %436 = vmatpush.bf16.msra.mxu0 0
    %437 = vmatpush.bf16.msra.mxu0 0
    %438 = vmatpush.bf16.msra.mxu0 %v426
    %439 = vmatpush.bf16.msra.mxu0 %v425
    %440 = vmatpush.bf16.msra.mxu0 %v424
    %441 = vmatpush.bf16.msra.mxu0 %v423
    %442 = vmatmul.bf16.gmra.mxu0 %v432
    %v443 = vpop.f32.mrf.mxu0
    %v444 = vadd.f32 %v403, %v443
    %v445 = vpop.f32.mrf.mxu0
    %v446 = vadd.f32 %v405, %v445
    %447 = vdwg.mxu0
    %vm448 = vcmask 1045504
    %v449 = vrot.slane %v331, 2
    %v450 = vrot.slane %v332, 2
    %v451 = vsel %vm448, %v449, %v450
    %v452 = vrot.slane %v333, 2
    %v453 = vrot.slane %v334, 2
    %v454 = vsel %vm448, %v452, %v453
    %v457 = vpack.c.bf16 %v454, %v451
    %v458 = vld [vmem:[%s3 + $0x40] sm:$0xf]
    %v459 = vld [vmem:[%s3 + $0x44] sm:$0xf]
    %v460 = vld [vmem:[%s3 + $0x48] sm:$0xf]
    %v461 = vld [vmem:[%s3 + $0x4c] sm:$0xf]
    %v462 = vld [vmem:[%s3 + $0x50] sm:$0xf]
    %v463 = vld [vmem:[%s3 + $0x54] sm:$0xf]
    %v464 = vld [vmem:[%s3 + $0x58] sm:$0xf]
    %v465 = vld [vmem:[%s3 + $0x5c] sm:$0xf]
    %v474 = vunpack.c.l.b16 %v458
    %v475 = vunpack.c.l.b16 %v459
    %v476 = vunpack.c.l.b16 %v460
    %v477 = vunpack.c.l.b16 %v461
    %v478 = vunpack.c.l.b16 %v462
    %v479 = vunpack.c.l.b16 %v463
    %v480 = vunpack.c.l.b16 %v464
    %v481 = vunpack.c.l.b16 %v465
    %v482 = vpack.c.b16 %v475, %v474
    %v483 = vpack.c.b16 %v477, %v476
    %v484 = vpack.c.b16 %v479, %v478
    %v485 = vpack.c.b16 %v481, %v480
    %v491 = vsel %vm285, %v457, 0
    %493 = vmatpush.bf16.msra.mxu0 0
    %494 = vmatpush.bf16.msra.mxu0 0
    %495 = vmatpush.bf16.msra.mxu0 0
    %496 = vmatpush.bf16.msra.mxu0 0
    %497 = vmatpush.bf16.msra.mxu0 %v485
    %498 = vmatpush.bf16.msra.mxu0 %v484
    %499 = vmatpush.bf16.msra.mxu0 %v483
    %500 = vmatpush.bf16.msra.mxu0 %v482
    %501 = vmatmul.bf16.gmra.mxu0 %v491
    %v502 = vpop.f32.mrf.mxu0
    %v503 = vadd.f32 0.0, %v502
    %v504 = vpop.f32.mrf.mxu0
    %v505 = vadd.f32 0.0, %v504
    %506 = vdwg.mxu0
    %v507 = vadd.f32 %v444, %v503
    %v508 = vadd.f32 %v446, %v505
    %v509 = vld [vmem:[%s4] sm:$0x1]
    %v511 = vperm.slane %v509, 0
    %v513 = vadd.f32 %v507, %v511
    %v514 = vadd.f32 %v508, %v511
    %v515 = vmax.f32 %v513, 0.0
    %v516 = vmax.f32 %v514, 0.0
    %v519 = vrot.slane %v515, 2
    %v520 = vrot.slane %v515, 4
    %v521 = vrot.slane %v515, 6
    %v522 = vrot.slane %v516, 2
    %v523 = vrot.slane %v516, 4
    %v524 = vrot.slane %v516, 6
    %vm531 = vcmask 1041408
    %v532 = vsel %vm531, %v515, -inf
    %v533 = vrot.slane %v532, 4
    %v534 = vmax.f32 %v532, %v533
    %v535 = vrot.slane %v534, 2
    %v536 = vmax.f32 %v534, %v535
    %v537 = vrot.slane %v536, 1
    %v538 = vmax.f32 %v536, %v537
    %v539 = vsel %vm531, %v519, -inf
    %v540 = vrot.slane %v539, 4
    %v541 = vmax.f32 %v539, %v540
    %v542 = vrot.slane %v541, 2
    %v543 = vmax.f32 %v541, %v542
    %v544 = vrot.slane %v543, 1
    %v545 = vmax.f32 %v543, %v544
    %v546 = vsel %vm531, %v520, -inf
    %v547 = vrot.slane %v546, 4
    %v548 = vmax.f32 %v546, %v547
    %v549 = vrot.slane %v548, 2
    %v550 = vmax.f32 %v548, %v549
    %v551 = vrot.slane %v550, 1
    %v552 = vmax.f32 %v550, %v551
    %v553 = vsel %vm531, %v521, -inf
    %v554 = vrot.slane %v553, 4
    %v555 = vmax.f32 %v553, %v554
    %v556 = vrot.slane %v555, 2
    %v557 = vmax.f32 %v555, %v556
    %v558 = vrot.slane %v557, 1
    %v559 = vmax.f32 %v557, %v558
    %v560 = vsel %vm531, %v516, -inf
    %v561 = vrot.slane %v560, 4
    %v562 = vmax.f32 %v560, %v561
    %v563 = vrot.slane %v562, 2
    %v564 = vmax.f32 %v562, %v563
    %v565 = vrot.slane %v564, 1
    %v566 = vmax.f32 %v564, %v565
    %v567 = vsel %vm531, %v522, -inf
    %v568 = vrot.slane %v567, 4
    %v569 = vmax.f32 %v567, %v568
    %v570 = vrot.slane %v569, 2
    %v571 = vmax.f32 %v569, %v570
    %v572 = vrot.slane %v571, 1
    %v573 = vmax.f32 %v571, %v572
    %v574 = vsel %vm531, %v523, -inf
    %v575 = vrot.slane %v574, 4
    %v576 = vmax.f32 %v574, %v575
    %v577 = vrot.slane %v576, 2
    %v578 = vmax.f32 %v576, %v577
    %v579 = vrot.slane %v578, 1
    %v580 = vmax.f32 %v578, %v579
    %v581 = vsel %vm531, %v524, -inf
    %v582 = vrot.slane %v581, 4
    %v583 = vmax.f32 %v581, %v582
    %v584 = vrot.slane %v583, 2
    %v585 = vmax.f32 %v583, %v584
    %v586 = vrot.slane %v585, 1
    %v587 = vmax.f32 %v585, %v586
    %v588 = vpack.c.bf16 %v538, %v538
    %v589 = vpack.c.bf16 %v545, %v545
    %v590 = vpack.c.bf16 %v552, %v552
    %v591 = vpack.c.bf16 %v559, %v559
    %v592 = vpack.c.bf16 %v566, %v566
    %v593 = vpack.c.bf16 %v573, %v573
    %v594 = vpack.c.bf16 %v580, %v580
    %v595 = vpack.c.bf16 %v587, %v587
    %v596 = vld [vmem:[%s5] sm:$0xff]
    %v597 = vld [vmem:[%s5 + $0x8] sm:$0xff]
    %v598 = vld [vmem:[%s5 + $0x10] sm:$0xff]
    %v599 = vld [vmem:[%s5 + $0x18] sm:$0xff]
    %v600 = vld [vmem:[%s5 + $0x20] sm:$0xff]
    %v601 = vld [vmem:[%s5 + $0x28] sm:$0xff]
    %v602 = vld [vmem:[%s5 + $0x30] sm:$0xff]
    %v603 = vld [vmem:[%s5 + $0x38] sm:$0xff]
    %v604 = vld [vmem:[%s5 + $0x40] sm:$0xff]
    %v605 = vld [vmem:[%s5 + $0x48] sm:$0xff]
    %v606 = vld [vmem:[%s5 + $0x50] sm:$0xff]
    %v607 = vld [vmem:[%s5 + $0x58] sm:$0xff]
    %v608 = vld [vmem:[%s5 + $0x60] sm:$0xff]
    %v609 = vld [vmem:[%s5 + $0x68] sm:$0xff]
    %v610 = vld [vmem:[%s5 + $0x70] sm:$0xff]
    %v611 = vld [vmem:[%s5 + $0x78] sm:$0xff]
    %v612 = vld [vmem:[%s5 + $0x80] sm:$0xff]
    %v613 = vld [vmem:[%s5 + $0x88] sm:$0xff]
    %v614 = vld [vmem:[%s5 + $0x90] sm:$0xff]
    %v615 = vld [vmem:[%s5 + $0x98] sm:$0xff]
    %v616 = vld [vmem:[%s5 + $0xa0] sm:$0xff]
    %v617 = vld [vmem:[%s5 + $0xa8] sm:$0xff]
    %v618 = vld [vmem:[%s5 + $0xb0] sm:$0xff]
    %v619 = vld [vmem:[%s5 + $0xb8] sm:$0xff]
    %v620 = vld [vmem:[%s5 + $0xc0] sm:$0xff]
    %v621 = vld [vmem:[%s5 + $0xc8] sm:$0xff]
    %v622 = vld [vmem:[%s5 + $0xd0] sm:$0xff]
    %v623 = vld [vmem:[%s5 + $0xd8] sm:$0xff]
    %v624 = vld [vmem:[%s5 + $0xe0] sm:$0xff]
    %v625 = vld [vmem:[%s5 + $0xe8] sm:$0xff]
    %v626 = vld [vmem:[%s5 + $0xf0] sm:$0xff]
    %v627 = vld [vmem:[%s5 + $0xf8] sm:$0xff]
    %v628 = vld [vmem:[%s7] sm:$0xf]
    %v630 = vperm.slane %v628, 0
    %v631 = vperm.slane %v628, 1
    %v632 = vperm.slane %v628, 2
    %v633 = vperm.slane %v628, 3
    %v646 = vunpack.c.l.b16 %v588
    %v647 = vunpack.c.l.b16 %v589
    %v648 = vunpack.c.l.b16 %v590
    %v649 = vunpack.c.l.b16 %v591
    %v650 = vunpack.c.l.b16 %v592
    %v651 = vunpack.c.l.b16 %v593
    %v652 = vunpack.c.l.b16 %v594
    %v653 = vunpack.c.l.b16 %v595
    %v654 = vsel %vm306, %v647, %v646
    %v655 = vsel %vm308, %v648, %v654
    %v656 = vsel %vm310, %v649, %v655
    %v657 = vsel %vm312, %v650, %v656
    %v658 = vsel %vm314, %v651, %v657
    %v659 = vsel %vm316, %v652, %v658
    %v660 = vsel %vm318, %v653, %v659
    %v661 = vpack.c.b16 %v660, %v660
    %v695 = vunpack.c.l.b16 %v596
    %v696 = vunpack.c.h.b16 %v596
    %v697 = vunpack.c.l.b16 %v597
    %v698 = vunpack.c.h.b16 %v597
    %v699 = vunpack.c.l.b16 %v598
    %v700 = vunpack.c.h.b16 %v598
    %v701 = vunpack.c.l.b16 %v599
    %v702 = vunpack.c.h.b16 %v599
    %v703 = vunpack.c.l.b16 %v600
    %v704 = vunpack.c.h.b16 %v600
    %v705 = vunpack.c.l.b16 %v601
    %v706 = vunpack.c.h.b16 %v601
    %v707 = vunpack.c.l.b16 %v602
    %v708 = vunpack.c.h.b16 %v602
    %v709 = vunpack.c.l.b16 %v603
    %v710 = vunpack.c.h.b16 %v603
    %v711 = vunpack.c.l.b16 %v604
    %v712 = vunpack.c.h.b16 %v604
    %v713 = vunpack.c.l.b16 %v605
    %v714 = vunpack.c.h.b16 %v605
    %v715 = vunpack.c.l.b16 %v606
    %v716 = vunpack.c.h.b16 %v606
    %v717 = vunpack.c.l.b16 %v607
    %v718 = vunpack.c.h.b16 %v607
    %v719 = vunpack.c.l.b16 %v608
    %v720 = vunpack.c.h.b16 %v608
    %v721 = vunpack.c.l.b16 %v609
    %v722 = vunpack.c.h.b16 %v609
    %v723 = vunpack.c.l.b16 %v610
    %v724 = vunpack.c.h.b16 %v610
    %v725 = vunpack.c.l.b16 %v611
    %v726 = vunpack.c.h.b16 %v611
    %v727 = vunpack.c.l.b16 %v612
    %v728 = vunpack.c.h.b16 %v612
    %v729 = vunpack.c.l.b16 %v613
    %v730 = vunpack.c.h.b16 %v613
    %v731 = vunpack.c.l.b16 %v614
    %v732 = vunpack.c.h.b16 %v614
    %v733 = vunpack.c.l.b16 %v615
    %v734 = vunpack.c.h.b16 %v615
    %v735 = vunpack.c.l.b16 %v616
    %v736 = vunpack.c.h.b16 %v616
    %v737 = vunpack.c.l.b16 %v617
    %v738 = vunpack.c.h.b16 %v617
    %v739 = vunpack.c.l.b16 %v618
    %v740 = vunpack.c.h.b16 %v618
    %v741 = vunpack.c.l.b16 %v619
    %v742 = vunpack.c.h.b16 %v619
    %v743 = vunpack.c.l.b16 %v620
    %v744 = vunpack.c.h.b16 %v620
    %v745 = vunpack.c.l.b16 %v621
    %v746 = vunpack.c.h.b16 %v621
    %v747 = vunpack.c.l.b16 %v622
    %v748 = vunpack.c.h.b16 %v622
    %v749 = vunpack.c.l.b16 %v623
    %v750 = vunpack.c.h.b16 %v623
    %v751 = vunpack.c.l.b16 %v624
    %v752 = vunpack.c.h.b16 %v624
    %v753 = vunpack.c.l.b16 %v625
    %v754 = vunpack.c.h.b16 %v625
    %v755 = vunpack.c.l.b16 %v626
    %v756 = vunpack.c.h.b16 %v626
    %v757 = vunpack.c.l.b16 %v627
    %v758 = vunpack.c.h.b16 %v627
    %v759 = vpack.c.b16 %v699, %v695
    %v760 = vpack.c.b16 %v700, %v696
    %v761 = vpack.c.b16 %v701, %v697
    %v762 = vpack.c.b16 %v702, %v698
    %v763 = vpack.c.b16 %v707, %v703
    %v764 = vpack.c.b16 %v708, %v704
    %v765 = vpack.c.b16 %v709, %v705
    %v766 = vpack.c.b16 %v710, %v706
    %v767 = vpack.c.b16 %v715, %v711
    %v768 = vpack.c.b16 %v716, %v712
    %v769 = vpack.c.b16 %v717, %v713
    %v770 = vpack.c.b16 %v718, %v714
    %v771 = vpack.c.b16 %v723, %v719
    %v772 = vpack.c.b16 %v724, %v720
    %v773 = vpack.c.b16 %v725, %v721
    %v774 = vpack.c.b16 %v726, %v722
    %v775 = vpack.c.b16 %v731, %v727
    %v776 = vpack.c.b16 %v732, %v728
    %v777 = vpack.c.b16 %v733, %v729
    %v778 = vpack.c.b16 %v734, %v730
    %v779 = vpack.c.b16 %v739, %v735
    %v780 = vpack.c.b16 %v740, %v736
    %v781 = vpack.c.b16 %v741, %v737
    %v782 = vpack.c.b16 %v742, %v738
    %v783 = vpack.c.b16 %v747, %v743
    %v784 = vpack.c.b16 %v748, %v744
    %v785 = vpack.c.b16 %v749, %v745
    %v786 = vpack.c.b16 %v750, %v746
    %v787 = vpack.c.b16 %v755, %v751
    %v788 = vpack.c.b16 %v756, %v752
    %v789 = vpack.c.b16 %v757, %v753
    %v790 = vpack.c.b16 %v758, %v754
    %823 = vmatpush.bf16.msra.mxu0 %v787
    %824 = vmatpush.bf16.msra.mxu0 %v783
    %825 = vmatpush.bf16.msra.mxu0 %v779
    %826 = vmatpush.bf16.msra.mxu0 %v775
    %827 = vmatpush.bf16.msra.mxu0 %v771
    %828 = vmatpush.bf16.msra.mxu0 %v767
    %829 = vmatpush.bf16.msra.mxu0 %v763
    %830 = vmatpush.bf16.msra.mxu0 %v759
    %831 = vmatmul.bf16.gmra.mxu0 %v661
    %v832 = vpop.f32.mrf.mxu0
    %v833 = vadd.f32 %v630, %v832
    %v834 = vpop.f32.mrf.mxu0
    %835 = vdwg.mxu0
    %836 = vmatpush.bf16.msra.mxu0 %v788
    %837 = vmatpush.bf16.msra.mxu0 %v784
    %838 = vmatpush.bf16.msra.mxu0 %v780
    %839 = vmatpush.bf16.msra.mxu0 %v776
    %840 = vmatpush.bf16.msra.mxu0 %v772
    %841 = vmatpush.bf16.msra.mxu0 %v768
    %842 = vmatpush.bf16.msra.mxu0 %v764
    %843 = vmatpush.bf16.msra.mxu0 %v760
    %844 = vmatmul.bf16.gmra.mxu0 %v661
    %v845 = vpop.f32.mrf.mxu0
    %v846 = vadd.f32 %v631, %v845
    %v847 = vpop.f32.mrf.mxu0
    %848 = vdwg.mxu0
    %849 = vmatpush.bf16.msra.mxu0 %v789
    %850 = vmatpush.bf16.msra.mxu0 %v785
    %851 = vmatpush.bf16.msra.mxu0 %v781
    %852 = vmatpush.bf16.msra.mxu0 %v777
    %853 = vmatpush.bf16.msra.mxu0 %v773
    %854 = vmatpush.bf16.msra.mxu0 %v769
    %855 = vmatpush.bf16.msra.mxu0 %v765
    %856 = vmatpush.bf16.msra.mxu0 %v761
    %857 = vmatmul.bf16.gmra.mxu0 %v661
    %v858 = vpop.f32.mrf.mxu0
    %v859 = vadd.f32 %v632, %v858
    %v860 = vpop.f32.mrf.mxu0
    %861 = vdwg.mxu0
    %862 = vmatpush.bf16.msra.mxu0 %v790
    %863 = vmatpush.bf16.msra.mxu0 %v786
    %864 = vmatpush.bf16.msra.mxu0 %v782
    %865 = vmatpush.bf16.msra.mxu0 %v778
    %866 = vmatpush.bf16.msra.mxu0 %v774
    %867 = vmatpush.bf16.msra.mxu0 %v770
    %868 = vmatpush.bf16.msra.mxu0 %v766
    %869 = vmatpush.bf16.msra.mxu0 %v762
    %870 = vmatmul.bf16.gmra.mxu0 %v661
    %v871 = vpop.f32.mrf.mxu0
    %v872 = vadd.f32 %v633, %v871
    %v873 = vpop.f32.mrf.mxu0
    %874 = vdwg.mxu0
    %v879 = vrot.slane %v846, 4
    %v880 = vrot.slane %v872, 4
    %vm881 = vcmask 1043456
    %v882 = vsel %vm881, %v833, %v879
    %v883 = vsel %vm881, %v859, %v880
    %v884 = vsel %vm881, %v879, %v833
    %v885 = vrot.slane %v884, 4
    %v886 = vsel %vm881, %v880, %v859
    %v887 = vrot.slane %v886, 4
    %v892 = vld [vmem:[%s6] sm:$0xff]
    %v893 = vld [vmem:[%s6 + $0x8] sm:$0xff]
    %v894 = vld [vmem:[%s6 + $0x10] sm:$0xff]
    %v895 = vld [vmem:[%s6 + $0x18] sm:$0xff]
    %v896 = vld [vmem:[%s6 + $0x20] sm:$0xff]
    %v897 = vld [vmem:[%s6 + $0x28] sm:$0xff]
    %v898 = vld [vmem:[%s6 + $0x30] sm:$0xff]
    %v899 = vld [vmem:[%s6 + $0x38] sm:$0xff]
    %v900 = vld [vmem:[%s6 + $0x40] sm:$0xff]
    %v901 = vld [vmem:[%s6 + $0x48] sm:$0xff]
    %v902 = vld [vmem:[%s6 + $0x50] sm:$0xff]
    %v903 = vld [vmem:[%s6 + $0x58] sm:$0xff]
    %v904 = vld [vmem:[%s6 + $0x60] sm:$0xff]
    %v905 = vld [vmem:[%s6 + $0x68] sm:$0xff]
    %v906 = vld [vmem:[%s6 + $0x70] sm:$0xff]
    %v907 = vld [vmem:[%s6 + $0x78] sm:$0xff]
    %v908 = vld [vmem:[%s6 + $0x80] sm:$0xff]
    %v909 = vld [vmem:[%s6 + $0x88] sm:$0xff]
    %v910 = vld [vmem:[%s6 + $0x90] sm:$0xff]
    %v911 = vld [vmem:[%s6 + $0x98] sm:$0xff]
    %v912 = vld [vmem:[%s6 + $0xa0] sm:$0xff]
    %v913 = vld [vmem:[%s6 + $0xa8] sm:$0xff]
    %v914 = vld [vmem:[%s6 + $0xb0] sm:$0xff]
    %v915 = vld [vmem:[%s6 + $0xb8] sm:$0xff]
    %v916 = vld [vmem:[%s6 + $0xc0] sm:$0xff]
    %v917 = vld [vmem:[%s6 + $0xc8] sm:$0xff]
    %v918 = vld [vmem:[%s6 + $0xd0] sm:$0xff]
    %v919 = vld [vmem:[%s6 + $0xd8] sm:$0xff]
    %v920 = vld [vmem:[%s6 + $0xe0] sm:$0xff]
    %v921 = vld [vmem:[%s6 + $0xe8] sm:$0xff]
    %v922 = vld [vmem:[%s6 + $0xf0] sm:$0xff]
    %v923 = vld [vmem:[%s6 + $0xf8] sm:$0xff]
    %v956 = vunpack.c.l.b16 %v892
    %v957 = vunpack.c.h.b16 %v892
    %v958 = vunpack.c.l.b16 %v893
    %v959 = vunpack.c.h.b16 %v893
    %v960 = vunpack.c.l.b16 %v894
    %v961 = vunpack.c.h.b16 %v894
    %v962 = vunpack.c.l.b16 %v895
    %v963 = vunpack.c.h.b16 %v895
    %v964 = vunpack.c.l.b16 %v896
    %v965 = vunpack.c.h.b16 %v896
    %v966 = vunpack.c.l.b16 %v897
    %v967 = vunpack.c.h.b16 %v897
    %v968 = vunpack.c.l.b16 %v898
    %v969 = vunpack.c.h.b16 %v898
    %v970 = vunpack.c.l.b16 %v899
    %v971 = vunpack.c.h.b16 %v899
    %v972 = vunpack.c.l.b16 %v900
    %v973 = vunpack.c.h.b16 %v900
    %v974 = vunpack.c.l.b16 %v901
    %v975 = vunpack.c.h.b16 %v901
    %v976 = vunpack.c.l.b16 %v902
    %v977 = vunpack.c.h.b16 %v902
    %v978 = vunpack.c.l.b16 %v903
    %v979 = vunpack.c.h.b16 %v903
    %v980 = vunpack.c.l.b16 %v904
    %v981 = vunpack.c.h.b16 %v904
    %v982 = vunpack.c.l.b16 %v905
    %v983 = vunpack.c.h.b16 %v905
    %v984 = vunpack.c.l.b16 %v906
    %v985 = vunpack.c.h.b16 %v906
    %v986 = vunpack.c.l.b16 %v907
    %v987 = vunpack.c.h.b16 %v907
    %v988 = vunpack.c.l.b16 %v908
    %v989 = vunpack.c.h.b16 %v908
    %v990 = vunpack.c.l.b16 %v909
    %v991 = vunpack.c.h.b16 %v909
    %v992 = vunpack.c.l.b16 %v910
    %v993 = vunpack.c.h.b16 %v910
    %v994 = vunpack.c.l.b16 %v911
    %v995 = vunpack.c.h.b16 %v911
    %v996 = vunpack.c.l.b16 %v912
    %v997 = vunpack.c.h.b16 %v912
    %v998 = vunpack.c.l.b16 %v913
    %v999 = vunpack.c.h.b16 %v913
    %v1000 = vunpack.c.l.b16 %v914
    %v1001 = vunpack.c.h.b16 %v914
    %v1002 = vunpack.c.l.b16 %v915
    %v1003 = vunpack.c.h.b16 %v915
    %v1004 = vunpack.c.l.b16 %v916
    %v1005 = vunpack.c.h.b16 %v916
    %v1006 = vunpack.c.l.b16 %v917
    %v1007 = vunpack.c.h.b16 %v917
    %v1008 = vunpack.c.l.b16 %v918
    %v1009 = vunpack.c.h.b16 %v918
    %v1010 = vunpack.c.l.b16 %v919
    %v1011 = vunpack.c.h.b16 %v919
    %v1012 = vunpack.c.l.b16 %v920
    %v1013 = vunpack.c.h.b16 %v920
    %v1014 = vunpack.c.l.b16 %v921
    %v1015 = vunpack.c.h.b16 %v921
    %v1016 = vunpack.c.l.b16 %v922
    %v1017 = vunpack.c.h.b16 %v922
    %v1018 = vunpack.c.l.b16 %v923
    %v1019 = vunpack.c.h.b16 %v923
    %v1020 = vpack.c.b16 %v960, %v956
    %v1021 = vpack.c.b16 %v961, %v957
    %v1022 = vpack.c.b16 %v962, %v958
    %v1023 = vpack.c.b16 %v963, %v959
    %v1024 = vpack.c.b16 %v968, %v964
    %v1025 = vpack.c.b16 %v969, %v965
    %v1026 = vpack.c.b16 %v970, %v966
    %v1027 = vpack.c.b16 %v971, %v967
    %v1028 = vpack.c.b16 %v976, %v972
    %v1029 = vpack.c.b16 %v977, %v973
    %v1030 = vpack.c.b16 %v978, %v974
    %v1031 = vpack.c.b16 %v979, %v975
    %v1032 = vpack.c.b16 %v984, %v980
    %v1033 = vpack.c.b16 %v985, %v981
    %v1034 = vpack.c.b16 %v986, %v982
    %v1035 = vpack.c.b16 %v987, %v983
    %v1036 = vpack.c.b16 %v992, %v988
    %v1037 = vpack.c.b16 %v993, %v989
    %v1038 = vpack.c.b16 %v994, %v990
    %v1039 = vpack.c.b16 %v995, %v991
    %v1040 = vpack.c.b16 %v1000, %v996
    %v1041 = vpack.c.b16 %v1001, %v997
    %v1042 = vpack.c.b16 %v1002, %v998
    %v1043 = vpack.c.b16 %v1003, %v999
    %v1044 = vpack.c.b16 %v1008, %v1004
    %v1045 = vpack.c.b16 %v1009, %v1005
    %v1046 = vpack.c.b16 %v1010, %v1006
    %v1047 = vpack.c.b16 %v1011, %v1007
    %v1048 = vpack.c.b16 %v1016, %v1012
    %v1049 = vpack.c.b16 %v1017, %v1013
    %v1050 = vpack.c.b16 %v1018, %v1014
    %v1051 = vpack.c.b16 %v1019, %v1015
    %1084 = vmatpush.bf16.msra.mxu0 %v1048
    %1085 = vmatpush.bf16.msra.mxu0 %v1044
    %1086 = vmatpush.bf16.msra.mxu0 %v1040
    %1087 = vmatpush.bf16.msra.mxu0 %v1036
    %1088 = vmatpush.bf16.msra.mxu0 %v1032
    %1089 = vmatpush.bf16.msra.mxu0 %v1028
    %1090 = vmatpush.bf16.msra.mxu0 %v1024
    %1091 = vmatpush.bf16.msra.mxu0 %v1020
    %1092 = vmatmul.bf16.gmra.mxu0 0
    %v1093 = vpop.f32.mrf.mxu0
    %v1094 = vadd.f32 0.0, %v1093
    %v1095 = vpop.f32.mrf.mxu0
    %1096 = vdwg.mxu0
    %1097 = vmatpush.bf16.msra.mxu0 %v1049
    %1098 = vmatpush.bf16.msra.mxu0 %v1045
    %1099 = vmatpush.bf16.msra.mxu0 %v1041
    %1100 = vmatpush.bf16.msra.mxu0 %v1037
    %1101 = vmatpush.bf16.msra.mxu0 %v1033
    %1102 = vmatpush.bf16.msra.mxu0 %v1029
    %1103 = vmatpush.bf16.msra.mxu0 %v1025
    %1104 = vmatpush.bf16.msra.mxu0 %v1021
    %1105 = vmatmul.bf16.gmra.mxu0 0
    %v1106 = vpop.f32.mrf.mxu0
    %v1107 = vadd.f32 0.0, %v1106
    %v1108 = vpop.f32.mrf.mxu0
    %1109 = vdwg.mxu0
    %1110 = vmatpush.bf16.msra.mxu0 %v1050
    %1111 = vmatpush.bf16.msra.mxu0 %v1046
    %1112 = vmatpush.bf16.msra.mxu0 %v1042
    %1113 = vmatpush.bf16.msra.mxu0 %v1038
    %1114 = vmatpush.bf16.msra.mxu0 %v1034
    %1115 = vmatpush.bf16.msra.mxu0 %v1030
    %1116 = vmatpush.bf16.msra.mxu0 %v1026
    %1117 = vmatpush.bf16.msra.mxu0 %v1022
    %1118 = vmatmul.bf16.gmra.mxu0 0
    %v1119 = vpop.f32.mrf.mxu0
    %v1120 = vadd.f32 0.0, %v1119
    %v1121 = vpop.f32.mrf.mxu0
    %1122 = vdwg.mxu0
    %1123 = vmatpush.bf16.msra.mxu0 %v1051
    %1124 = vmatpush.bf16.msra.mxu0 %v1047
    %1125 = vmatpush.bf16.msra.mxu0 %v1043
    %1126 = vmatpush.bf16.msra.mxu0 %v1039
    %1127 = vmatpush.bf16.msra.mxu0 %v1035
    %1128 = vmatpush.bf16.msra.mxu0 %v1031
    %1129 = vmatpush.bf16.msra.mxu0 %v1027
    %1130 = vmatpush.bf16.msra.mxu0 %v1023
    %1131 = vmatmul.bf16.gmra.mxu0 0
    %v1132 = vpop.f32.mrf.mxu0
    %v1133 = vadd.f32 0.0, %v1132
    %v1134 = vpop.f32.mrf.mxu0
    %1135 = vdwg.mxu0
    %v1140 = vrot.slane %v1107, 4
    %v1141 = vrot.slane %v1133, 4
    %v1142 = vsel %vm881, %v1094, %v1140
    %v1143 = vsel %vm881, %v1120, %v1141
    %v1144 = vrot.slane %v1142, 1
    %v1145 = vrot.slane %v1143, 1
    %v1150 = vadd.f32 %v882, %v1142
    %v1151 = vadd.f32 %v883, %v1143
    %v1152 = vadd.f32 %v885, %v1144
    %v1153 = vadd.f32 %v887, %v1145
    %v1154 = vxor.u32 %v1150, 2147483648
    %v1155 = vxor.u32 %v1151, 2147483648
    %v1156 = vxor.u32 %v1152, 2147483648
    %v1157 = vxor.u32 %v1153, 2147483648
    %v1158 = vmul.f32 %v1154, 1.442695
    %v1159 = vpow.pop %v1158
    %v1160 = vmul.f32 %v1155, 1.442695
    %v1161 = vpow.pop %v1160
    %v1162 = vmul.f32 %v1156, 1.442695
    %v1163 = vpow.pop %v1162
    %v1164 = vmul.f32 %v1157, 1.442695
    %v1165 = vpow.pop %v1164
    %v1166 = vadd.f32 %v1159, 1.0
    %v1167 = vadd.f32 %v1161, 1.0
    %v1168 = vadd.f32 %v1163, 1.0
    %v1169 = vadd.f32 %v1165, 1.0
    %v1170 = vrcp.pop %v1166
    %v1171 = vmul.f32 %v1166, %v1170
    %v1172 = vsub.f32 1.0, %v1171
    %v1173 = vmul.f32 %v1170, %v1172
    %v1174 = vadd.f32 %v1170, %v1173
    %vm1175 = vweird.f32 %v1166
    %vm1176 = vweird.f32 %v1170
    %vm1177 = vmor %vm1175, %vm1176
    %v1178 = vsel %vm1177, %v1170, %v1174
    %v1179 = vand.u32 2147483647, %v1166
    %vm1180 = vcmp.eq.f32.partialorder %v1179, 8.507059e+37
    %v1181 = vand.u32 %v1166, 2147483648
    %v1182 = vor.u32 1.1754944e-38, %v1181
    %v1183 = vsel %vm1180, %v1182, %v1178
    %v1184 = vmul.f32 1.0, %v1183
    %v1185 = vrcp.pop %v1167
    %v1186 = vmul.f32 %v1167, %v1185
    %v1187 = vsub.f32 1.0, %v1186
    %v1188 = vmul.f32 %v1185, %v1187
    %v1189 = vadd.f32 %v1185, %v1188
    %vm1190 = vweird.f32 %v1167
    %vm1191 = vweird.f32 %v1185
    %vm1192 = vmor %vm1190, %vm1191
    %v1193 = vsel %vm1192, %v1185, %v1189
    %v1194 = vand.u32 2147483647, %v1167
    %vm1195 = vcmp.eq.f32.partialorder %v1194, 8.507059e+37
    %v1196 = vand.u32 %v1167, 2147483648
    %v1197 = vor.u32 1.1754944e-38, %v1196
    %v1198 = vsel %vm1195, %v1197, %v1193
    %v1199 = vmul.f32 1.0, %v1198
    %v1200 = vrcp.pop %v1168
    %v1201 = vmul.f32 %v1168, %v1200
    %v1202 = vsub.f32 1.0, %v1201
    %v1203 = vmul.f32 %v1200, %v1202
    %v1204 = vadd.f32 %v1200, %v1203
    %vm1205 = vweird.f32 %v1168
    %vm1206 = vweird.f32 %v1200
    %vm1207 = vmor %vm1205, %vm1206
    %v1208 = vsel %vm1207, %v1200, %v1204
    %v1209 = vand.u32 2147483647, %v1168
    %vm1210 = vcmp.eq.f32.partialorder %v1209, 8.507059e+37
    %v1211 = vand.u32 %v1168, 2147483648
    %v1212 = vor.u32 1.1754944e-38, %v1211
    %v1213 = vsel %vm1210, %v1212, %v1208
    %v1214 = vmul.f32 1.0, %v1213
    %v1215 = vrcp.pop %v1169
    %v1216 = vmul.f32 %v1169, %v1215
    %v1217 = vsub.f32 1.0, %v1216
    %v1218 = vmul.f32 %v1215, %v1217
    %v1219 = vadd.f32 %v1215, %v1218
    %vm1220 = vweird.f32 %v1169
    %vm1221 = vweird.f32 %v1215
    %vm1222 = vmor %vm1220, %vm1221
    %v1223 = vsel %vm1222, %v1215, %v1219
    %v1224 = vand.u32 2147483647, %v1169
    %vm1225 = vcmp.eq.f32.partialorder %v1224, 8.507059e+37
    %v1226 = vand.u32 %v1169, 2147483648
    %v1227 = vor.u32 1.1754944e-38, %v1226
    %v1228 = vsel %vm1225, %v1227, %v1223
    %v1229 = vmul.f32 1.0, %v1228
    %v1232 = vrot.slane %v1151, 4
    %v1233 = vrot.slane %v1153, 4
    %v1236 = vtanh.pop %v1232
    %v1237 = vtanh.pop %v1233
    %v1240 = vrot.slane %v1184, 4
    %v1241 = vrot.slane %v1214, 4
    %v1244 = vmul.f32 %v1240, 0.0
    %v1245 = vmul.f32 %v1241, 0.0
    %v1246 = vmul.f32 %v1184, %v1236
    %v1247 = vmul.f32 %v1214, %v1237
    %v1248 = vadd.f32 %v1244, %v1246
    %v1249 = vadd.f32 %v1245, %v1247
    %v1250 = vtanh.pop %v1248
    %v1251 = vtanh.pop %v1249
    %v1252 = vmul.f32 %v1199, %v1250
    %v1253 = vmul.f32 %v1229, %v1251
    %v1254 = vpack.c.bf16 %v1252, %v1252
    %v1255 = vpack.c.bf16 %v1253, %v1253
    %v1258 = vunpack.c.l.b16 %v1254
    %v1259 = vunpack.c.l.b16 %v1255
    %v1260 = vrot.slane %v1259, 7
    %v1261 = vsel %vm306, %v1260, %v1258
    %v1262 = vpack.c.b16 %v1261, %v1261
    %1264 = vmatpush.bf16.msra.mxu0 %v1048
    %1265 = vmatpush.bf16.msra.mxu0 %v1044
    %1266 = vmatpush.bf16.msra.mxu0 %v1040
    %1267 = vmatpush.bf16.msra.mxu0 %v1036
    %1268 = vmatpush.bf16.msra.mxu0 %v1032
    %1269 = vmatpush.bf16.msra.mxu0 %v1028
    %1270 = vmatpush.bf16.msra.mxu0 %v1024
    %1271 = vmatpush.bf16.msra.mxu0 %v1020
    %1272 = vmatmul.bf16.gmra.mxu0 %v1262
    %v1273 = vpop.f32.mrf.mxu0
    %v1274 = vadd.f32 0.0, %v1273
    %v1275 = vpop.f32.mrf.mxu0
    %1276 = vdwg.mxu0
    %1277 = vmatpush.bf16.msra.mxu0 %v1049
    %1278 = vmatpush.bf16.msra.mxu0 %v1045
    %1279 = vmatpush.bf16.msra.mxu0 %v1041
    %1280 = vmatpush.bf16.msra.mxu0 %v1037
    %1281 = vmatpush.bf16.msra.mxu0 %v1033
    %1282 = vmatpush.bf16.msra.mxu0 %v1029
    %1283 = vmatpush.bf16.msra.mxu0 %v1025
    %1284 = vmatpush.bf16.msra.mxu0 %v1021
    %1285 = vmatmul.bf16.gmra.mxu0 %v1262
    %v1286 = vpop.f32.mrf.mxu0
    %v1287 = vadd.f32 0.0, %v1286
    %v1288 = vpop.f32.mrf.mxu0
    %1289 = vdwg.mxu0
    %1290 = vmatpush.bf16.msra.mxu0 %v1050
    %1291 = vmatpush.bf16.msra.mxu0 %v1046
    %1292 = vmatpush.bf16.msra.mxu0 %v1042
    %1293 = vmatpush.bf16.msra.mxu0 %v1038
    %1294 = vmatpush.bf16.msra.mxu0 %v1034
    %1295 = vmatpush.bf16.msra.mxu0 %v1030
    %1296 = vmatpush.bf16.msra.mxu0 %v1026
    %1297 = vmatpush.bf16.msra.mxu0 %v1022
    %1298 = vmatmul.bf16.gmra.mxu0 %v1262
    %v1299 = vpop.f32.mrf.mxu0
    %v1300 = vadd.f32 0.0, %v1299
    %v1301 = vpop.f32.mrf.mxu0
    %1302 = vdwg.mxu0
    %1303 = vmatpush.bf16.msra.mxu0 %v1051
    %1304 = vmatpush.bf16.msra.mxu0 %v1047
    %1305 = vmatpush.bf16.msra.mxu0 %v1043
    %1306 = vmatpush.bf16.msra.mxu0 %v1039
    %1307 = vmatpush.bf16.msra.mxu0 %v1035
    %1308 = vmatpush.bf16.msra.mxu0 %v1031
    %1309 = vmatpush.bf16.msra.mxu0 %v1027
    %1310 = vmatpush.bf16.msra.mxu0 %v1023
    %1311 = vmatmul.bf16.gmra.mxu0 %v1262
    %v1312 = vpop.f32.mrf.mxu0
    %v1313 = vadd.f32 0.0, %v1312
    %v1314 = vpop.f32.mrf.mxu0
    %1315 = vdwg.mxu0
    %v1320 = vrot.slane %v1287, 4
    %v1321 = vrot.slane %v1313, 4
    %v1322 = vsel %vm881, %v1274, %v1320
    %v1323 = vsel %vm881, %v1300, %v1321
    %v1324 = vrot.slane %v1322, 7
    %v1325 = vrot.slane %v1323, 7
    %v1330 = vadd.f32 %v882, %v1324
    %v1331 = vadd.f32 %v883, %v1325
    %v1332 = vadd.f32 %v885, %v1322
    %v1333 = vadd.f32 %v887, %v1323
    %v1334 = vxor.u32 %v1330, 2147483648
    %v1335 = vxor.u32 %v1331, 2147483648
    %v1336 = vxor.u32 %v1332, 2147483648
    %v1337 = vxor.u32 %v1333, 2147483648
    %v1338 = vmul.f32 %v1334, 1.442695
    %v1339 = vpow.pop %v1338
    %v1340 = vmul.f32 %v1335, 1.442695
    %v1341 = vpow.pop %v1340
    %v1342 = vmul.f32 %v1336, 1.442695
    %v1343 = vpow.pop %v1342
    %v1344 = vmul.f32 %v1337, 1.442695
    %v1345 = vpow.pop %v1344
    %v1346 = vadd.f32 %v1339, 1.0
    %v1347 = vadd.f32 %v1341, 1.0
    %v1348 = vadd.f32 %v1343, 1.0
    %v1349 = vadd.f32 %v1345, 1.0
    %v1350 = vrcp.pop %v1346
    %v1351 = vmul.f32 %v1346, %v1350
    %v1352 = vsub.f32 1.0, %v1351
    %v1353 = vmul.f32 %v1350, %v1352
    %v1354 = vadd.f32 %v1350, %v1353
    %vm1355 = vweird.f32 %v1346
    %vm1356 = vweird.f32 %v1350
    %vm1357 = vmor %vm1355, %vm1356
    %v1358 = vsel %vm1357, %v1350, %v1354
    %v1359 = vand.u32 2147483647, %v1346
    %vm1360 = vcmp.eq.f32.partialorder %v1359, 8.507059e+37
    %v1361 = vand.u32 %v1346, 2147483648
    %v1362 = vor.u32 1.1754944e-38, %v1361
    %v1363 = vsel %vm1360, %v1362, %v1358
    %v1364 = vmul.f32 1.0, %v1363
    %v1365 = vrcp.pop %v1347
    %v1366 = vmul.f32 %v1347, %v1365
    %v1367 = vsub.f32 1.0, %v1366
    %v1368 = vmul.f32 %v1365, %v1367
    %v1369 = vadd.f32 %v1365, %v1368
    %vm1370 = vweird.f32 %v1347
    %vm1371 = vweird.f32 %v1365
    %vm1372 = vmor %vm1370, %vm1371
    %v1373 = vsel %vm1372, %v1365, %v1369
    %v1374 = vand.u32 2147483647, %v1347
    %vm1375 = vcmp.eq.f32.partialorder %v1374, 8.507059e+37
    %v1376 = vand.u32 %v1347, 2147483648
    %v1377 = vor.u32 1.1754944e-38, %v1376
    %v1378 = vsel %vm1375, %v1377, %v1373
    %v1379 = vmul.f32 1.0, %v1378
    %v1380 = vrcp.pop %v1348
    %v1381 = vmul.f32 %v1348, %v1380
    %v1382 = vsub.f32 1.0, %v1381
    %v1383 = vmul.f32 %v1380, %v1382
    %v1384 = vadd.f32 %v1380, %v1383
    %vm1385 = vweird.f32 %v1348
    %vm1386 = vweird.f32 %v1380
    %vm1387 = vmor %vm1385, %vm1386
    %v1388 = vsel %vm1387, %v1380, %v1384
    %v1389 = vand.u32 2147483647, %v1348
    %vm1390 = vcmp.eq.f32.partialorder %v1389, 8.507059e+37
    %v1391 = vand.u32 %v1348, 2147483648
    %v1392 = vor.u32 1.1754944e-38, %v1391
    %v1393 = vsel %vm1390, %v1392, %v1388
    %v1394 = vmul.f32 1.0, %v1393
    %v1395 = vrcp.pop %v1349
    %v1396 = vmul.f32 %v1349, %v1395
    %v1397 = vsub.f32 1.0, %v1396
    %v1398 = vmul.f32 %v1395, %v1397
    %v1399 = vadd.f32 %v1395, %v1398
    %vm1400 = vweird.f32 %v1349
    %vm1401 = vweird.f32 %v1395
    %vm1402 = vmor %vm1400, %vm1401
    %v1403 = vsel %vm1402, %v1395, %v1399
    %v1404 = vand.u32 2147483647, %v1349
    %vm1405 = vcmp.eq.f32.partialorder %v1404, 8.507059e+37
    %v1406 = vand.u32 %v1349, 2147483648
    %v1407 = vor.u32 1.1754944e-38, %v1406
    %v1408 = vsel %vm1405, %v1407, %v1403
    %v1409 = vmul.f32 1.0, %v1408
    %v1412 = vrot.slane %v1331, 4
    %v1413 = vrot.slane %v1333, 4
    %v1416 = vtanh.pop %v1412
    %v1417 = vtanh.pop %v1413
    %v1420 = vrot.slane %v1364, 4
    %v1421 = vrot.slane %v1394, 4
    %v1426 = vrot.slane %v1248, 7
    %v1427 = vrot.slane %v1249, 7
    %v1430 = vmul.f32 %v1420, %v1426
    %v1431 = vmul.f32 %v1421, %v1427
    %v1432 = vmul.f32 %v1364, %v1416
    %v1433 = vmul.f32 %v1394, %v1417
    %v1434 = vadd.f32 %v1430, %v1432
    %v1435 = vadd.f32 %v1431, %v1433
    %v1436 = vtanh.pop %v1434
    %v1437 = vtanh.pop %v1435
    %v1438 = vmul.f32 %v1379, %v1436
    %v1439 = vmul.f32 %v1409, %v1437
    %v1440 = vpack.c.bf16 %v1438, %v1438
    %v1441 = vpack.c.bf16 %v1439, %v1439
    %v1444 = vunpack.c.l.b16 %v1440
    %v1445 = vunpack.c.l.b16 %v1441
    %v1446 = vrot.slane %v1444, 1
    %v1447 = vsel %vm306, %v1445, %v1446
    %v1448 = vpack.c.b16 %v1447, %v1447
    %1450 = vmatpush.bf16.msra.mxu0 %v1048
    %1451 = vmatpush.bf16.msra.mxu0 %v1044
    %1452 = vmatpush.bf16.msra.mxu0 %v1040
    %1453 = vmatpush.bf16.msra.mxu0 %v1036
    %1454 = vmatpush.bf16.msra.mxu0 %v1032
    %1455 = vmatpush.bf16.msra.mxu0 %v1028
    %1456 = vmatpush.bf16.msra.mxu0 %v1024
    %1457 = vmatpush.bf16.msra.mxu0 %v1020
    %1458 = vmatmul.bf16.gmra.mxu0 %v1448
    %v1459 = vpop.f32.mrf.mxu0
    %v1460 = vadd.f32 0.0, %v1459
    %v1461 = vpop.f32.mrf.mxu0
    %1462 = vdwg.mxu0
    %1463 = vmatpush.bf16.msra.mxu0 %v1049
    %1464 = vmatpush.bf16.msra.mxu0 %v1045
    %1465 = vmatpush.bf16.msra.mxu0 %v1041
    %1466 = vmatpush.bf16.msra.mxu0 %v1037
    %1467 = vmatpush.bf16.msra.mxu0 %v1033
    %1468 = vmatpush.bf16.msra.mxu0 %v1029
    %1469 = vmatpush.bf16.msra.mxu0 %v1025
    %1470 = vmatpush.bf16.msra.mxu0 %v1021
    %1471 = vmatmul.bf16.gmra.mxu0 %v1448
    %v1472 = vpop.f32.mrf.mxu0
    %v1473 = vadd.f32 0.0, %v1472
    %v1474 = vpop.f32.mrf.mxu0
    %1475 = vdwg.mxu0
    %1476 = vmatpush.bf16.msra.mxu0 %v1050
    %1477 = vmatpush.bf16.msra.mxu0 %v1046
    %1478 = vmatpush.bf16.msra.mxu0 %v1042
    %1479 = vmatpush.bf16.msra.mxu0 %v1038
    %1480 = vmatpush.bf16.msra.mxu0 %v1034
    %1481 = vmatpush.bf16.msra.mxu0 %v1030
    %1482 = vmatpush.bf16.msra.mxu0 %v1026
    %1483 = vmatpush.bf16.msra.mxu0 %v1022
    %1484 = vmatmul.bf16.gmra.mxu0 %v1448
    %v1485 = vpop.f32.mrf.mxu0
    %v1486 = vadd.f32 0.0, %v1485
    %v1487 = vpop.f32.mrf.mxu0
    %1488 = vdwg.mxu0
    %1489 = vmatpush.bf16.msra.mxu0 %v1051
    %1490 = vmatpush.bf16.msra.mxu0 %v1047
    %1491 = vmatpush.bf16.msra.mxu0 %v1043
    %1492 = vmatpush.bf16.msra.mxu0 %v1039
    %1493 = vmatpush.bf16.msra.mxu0 %v1035
    %1494 = vmatpush.bf16.msra.mxu0 %v1031
    %1495 = vmatpush.bf16.msra.mxu0 %v1027
    %1496 = vmatpush.bf16.msra.mxu0 %v1023
    %1497 = vmatmul.bf16.gmra.mxu0 %v1448
    %v1498 = vpop.f32.mrf.mxu0
    %v1499 = vadd.f32 0.0, %v1498
    %v1500 = vpop.f32.mrf.mxu0
    %1501 = vdwg.mxu0
    %v1506 = vrot.slane %v1473, 4
    %v1507 = vrot.slane %v1499, 4
    %v1508 = vsel %vm881, %v1460, %v1506
    %v1509 = vsel %vm881, %v1486, %v1507
    %v1510 = vrot.slane %v1508, 6
    %v1511 = vrot.slane %v1509, 6
    %v1512 = vrot.slane %v1508, 7
    %v1513 = vrot.slane %v1509, 7
    %v1518 = vadd.f32 %v882, %v1510
    %v1519 = vadd.f32 %v883, %v1511
    %v1520 = vadd.f32 %v885, %v1512
    %v1521 = vadd.f32 %v887, %v1513
    %v1522 = vxor.u32 %v1518, 2147483648
    %v1523 = vxor.u32 %v1519, 2147483648
    %v1524 = vxor.u32 %v1520, 2147483648
    %v1525 = vxor.u32 %v1521, 2147483648
    %v1526 = vmul.f32 %v1522, 1.442695
    %v1527 = vpow.pop %v1526
    %v1528 = vmul.f32 %v1523, 1.442695
    %v1529 = vpow.pop %v1528
    %v1530 = vmul.f32 %v1524, 1.442695
    %v1531 = vpow.pop %v1530
    %v1532 = vmul.f32 %v1525, 1.442695
    %v1533 = vpow.pop %v1532
    %v1534 = vadd.f32 %v1527, 1.0
    %v1535 = vadd.f32 %v1529, 1.0
    %v1536 = vadd.f32 %v1531, 1.0
    %v1537 = vadd.f32 %v1533, 1.0
    %v1538 = vrcp.pop %v1534
    %v1539 = vmul.f32 %v1534, %v1538
    %v1540 = vsub.f32 1.0, %v1539
    %v1541 = vmul.f32 %v1538, %v1540
    %v1542 = vadd.f32 %v1538, %v1541
    %vm1543 = vweird.f32 %v1534
    %vm1544 = vweird.f32 %v1538
    %vm1545 = vmor %vm1543, %vm1544
    %v1546 = vsel %vm1545, %v1538, %v1542
    %v1547 = vand.u32 2147483647, %v1534
    %vm1548 = vcmp.eq.f32.partialorder %v1547, 8.507059e+37
    %v1549 = vand.u32 %v1534, 2147483648
    %v1550 = vor.u32 1.1754944e-38, %v1549
    %v1551 = vsel %vm1548, %v1550, %v1546
    %v1552 = vmul.f32 1.0, %v1551
    %v1553 = vrcp.pop %v1535
    %v1554 = vmul.f32 %v1535, %v1553
    %v1555 = vsub.f32 1.0, %v1554
    %v1556 = vmul.f32 %v1553, %v1555
    %v1557 = vadd.f32 %v1553, %v1556
    %vm1558 = vweird.f32 %v1535
    %vm1559 = vweird.f32 %v1553
    %vm1560 = vmor %vm1558, %vm1559
    %v1561 = vsel %vm1560, %v1553, %v1557
    %v1562 = vand.u32 2147483647, %v1535
    %vm1563 = vcmp.eq.f32.partialorder %v1562, 8.507059e+37
    %v1564 = vand.u32 %v1535, 2147483648
    %v1565 = vor.u32 1.1754944e-38, %v1564
    %v1566 = vsel %vm1563, %v1565, %v1561
    %v1567 = vmul.f32 1.0, %v1566
    %v1568 = vrcp.pop %v1536
    %v1569 = vmul.f32 %v1536, %v1568
    %v1570 = vsub.f32 1.0, %v1569
    %v1571 = vmul.f32 %v1568, %v1570
    %v1572 = vadd.f32 %v1568, %v1571
    %vm1573 = vweird.f32 %v1536
    %vm1574 = vweird.f32 %v1568
    %vm1575 = vmor %vm1573, %vm1574
    %v1576 = vsel %vm1575, %v1568, %v1572
    %v1577 = vand.u32 2147483647, %v1536
    %vm1578 = vcmp.eq.f32.partialorder %v1577, 8.507059e+37
    %v1579 = vand.u32 %v1536, 2147483648
    %v1580 = vor.u32 1.1754944e-38, %v1579
    %v1581 = vsel %vm1578, %v1580, %v1576
    %v1582 = vmul.f32 1.0, %v1581
    %v1583 = vrcp.pop %v1537
    %v1584 = vmul.f32 %v1537, %v1583
    %v1585 = vsub.f32 1.0, %v1584
    %v1586 = vmul.f32 %v1583, %v1585
    %v1587 = vadd.f32 %v1583, %v1586
    %vm1588 = vweird.f32 %v1537
    %vm1589 = vweird.f32 %v1583
    %vm1590 = vmor %vm1588, %vm1589
    %v1591 = vsel %vm1590, %v1583, %v1587
    %v1592 = vand.u32 2147483647, %v1537
    %vm1593 = vcmp.eq.f32.partialorder %v1592, 8.507059e+37
    %v1594 = vand.u32 %v1537, 2147483648
    %v1595 = vor.u32 1.1754944e-38, %v1594
    %v1596 = vsel %vm1593, %v1595, %v1591
    %v1597 = vmul.f32 1.0, %v1596
    %v1600 = vrot.slane %v1519, 4
    %v1601 = vrot.slane %v1521, 4
    %v1604 = vtanh.pop %v1600
    %v1605 = vtanh.pop %v1601
    %v1608 = vrot.slane %v1552, 4
    %v1609 = vrot.slane %v1582, 4
    %v1614 = vrot.slane %v1434, 7
    %v1615 = vrot.slane %v1435, 7
    %v1618 = vmul.f32 %v1608, %v1614
    %v1619 = vmul.f32 %v1609, %v1615
    %v1620 = vmul.f32 %v1552, %v1604
    %v1621 = vmul.f32 %v1582, %v1605
    %v1622 = vadd.f32 %v1618, %v1620
    %v1623 = vadd.f32 %v1619, %v1621
    %v1624 = vtanh.pop %v1622
    %v1625 = vtanh.pop %v1623
    %v1626 = vmul.f32 %v1567, %v1624
    %v1627 = vmul.f32 %v1597, %v1625
    %v1628 = vpack.c.bf16 %v1626, %v1626
    %v1629 = vpack.c.bf16 %v1627, %v1627
    %v1632 = vunpack.c.l.b16 %v1628
    %v1633 = vunpack.c.l.b16 %v1629
    %v1634 = vrot.slane %v1632, 2
    %v1635 = vrot.slane %v1633, 1
    %v1636 = vsel %vm306, %v1635, %v1634
    %v1637 = vpack.c.b16 %v1636, %v1636
    %1639 = vmatpush.bf16.msra.mxu0 %v1048
    %1640 = vmatpush.bf16.msra.mxu0 %v1044
    %1641 = vmatpush.bf16.msra.mxu0 %v1040
    %1642 = vmatpush.bf16.msra.mxu0 %v1036
    %1643 = vmatpush.bf16.msra.mxu0 %v1032
    %1644 = vmatpush.bf16.msra.mxu0 %v1028
    %1645 = vmatpush.bf16.msra.mxu0 %v1024
    %1646 = vmatpush.bf16.msra.mxu0 %v1020
    %1647 = vmatmul.bf16.gmra.mxu0 %v1637
    %v1648 = vpop.f32.mrf.mxu0
    %v1649 = vadd.f32 0.0, %v1648
    %v1650 = vpop.f32.mrf.mxu0
    %1651 = vdwg.mxu0
    %1652 = vmatpush.bf16.msra.mxu0 %v1049
    %1653 = vmatpush.bf16.msra.mxu0 %v1045
    %1654 = vmatpush.bf16.msra.mxu0 %v1041
    %1655 = vmatpush.bf16.msra.mxu0 %v1037
    %1656 = vmatpush.bf16.msra.mxu0 %v1033
    %1657 = vmatpush.bf16.msra.mxu0 %v1029
    %1658 = vmatpush.bf16.msra.mxu0 %v1025
    %1659 = vmatpush.bf16.msra.mxu0 %v1021
    %1660 = vmatmul.bf16.gmra.mxu0 %v1637
    %v1661 = vpop.f32.mrf.mxu0
    %v1662 = vadd.f32 0.0, %v1661
    %v1663 = vpop.f32.mrf.mxu0
    %1664 = vdwg.mxu0
    %1665 = vmatpush.bf16.msra.mxu0 %v1050
    %1666 = vmatpush.bf16.msra.mxu0 %v1046
    %1667 = vmatpush.bf16.msra.mxu0 %v1042
    %1668 = vmatpush.bf16.msra.mxu0 %v1038
    %1669 = vmatpush.bf16.msra.mxu0 %v1034
    %1670 = vmatpush.bf16.msra.mxu0 %v1030
    %1671 = vmatpush.bf16.msra.mxu0 %v1026
    %1672 = vmatpush.bf16.msra.mxu0 %v1022
    %1673 = vmatmul.bf16.gmra.mxu0 %v1637
    %v1674 = vpop.f32.mrf.mxu0
    %v1675 = vadd.f32 0.0, %v1674
    %v1676 = vpop.f32.mrf.mxu0
    %1677 = vdwg.mxu0
    %1678 = vmatpush.bf16.msra.mxu0 %v1051
    %1679 = vmatpush.bf16.msra.mxu0 %v1047
    %1680 = vmatpush.bf16.msra.mxu0 %v1043
    %1681 = vmatpush.bf16.msra.mxu0 %v1039
    %1682 = vmatpush.bf16.msra.mxu0 %v1035
    %1683 = vmatpush.bf16.msra.mxu0 %v1031
    %1684 = vmatpush.bf16.msra.mxu0 %v1027
    %1685 = vmatpush.bf16.msra.mxu0 %v1023
    %1686 = vmatmul.bf16.gmra.mxu0 %v1637
    %v1687 = vpop.f32.mrf.mxu0
    %v1688 = vadd.f32 0.0, %v1687
    %v1689 = vpop.f32.mrf.mxu0
    %1690 = vdwg.mxu0
    %v1695 = vrot.slane %v1662, 4
    %v1696 = vrot.slane %v1688, 4
    %v1697 = vsel %vm881, %v1649, %v1695
    %v1698 = vsel %vm881, %v1675, %v1696
    %v1699 = vrot.slane %v1697, 5
    %v1700 = vrot.slane %v1698, 5
    %v1701 = vrot.slane %v1697, 6
    %v1702 = vrot.slane %v1698, 6
    %v1707 = vadd.f32 %v882, %v1699
    %v1708 = vadd.f32 %v883, %v1700
    %v1709 = vadd.f32 %v885, %v1701
    %v1710 = vadd.f32 %v887, %v1702
    %v1711 = vxor.u32 %v1707, 2147483648
    %v1712 = vxor.u32 %v1708, 2147483648
    %v1713 = vxor.u32 %v1709, 2147483648
    %v1714 = vxor.u32 %v1710, 2147483648
    %v1715 = vmul.f32 %v1711, 1.442695
    %v1716 = vpow.pop %v1715
    %v1717 = vmul.f32 %v1712, 1.442695
    %v1718 = vpow.pop %v1717
    %v1719 = vmul.f32 %v1713, 1.442695
    %v1720 = vpow.pop %v1719
    %v1721 = vmul.f32 %v1714, 1.442695
    %v1722 = vpow.pop %v1721
    %v1723 = vadd.f32 %v1716, 1.0
    %v1724 = vadd.f32 %v1718, 1.0
    %v1725 = vadd.f32 %v1720, 1.0
    %v1726 = vadd.f32 %v1722, 1.0
    %v1727 = vrcp.pop %v1723
    %v1728 = vmul.f32 %v1723, %v1727
    %v1729 = vsub.f32 1.0, %v1728
    %v1730 = vmul.f32 %v1727, %v1729
    %v1731 = vadd.f32 %v1727, %v1730
    %vm1732 = vweird.f32 %v1723
    %vm1733 = vweird.f32 %v1727
    %vm1734 = vmor %vm1732, %vm1733
    %v1735 = vsel %vm1734, %v1727, %v1731
    %v1736 = vand.u32 2147483647, %v1723
    %vm1737 = vcmp.eq.f32.partialorder %v1736, 8.507059e+37
    %v1738 = vand.u32 %v1723, 2147483648
    %v1739 = vor.u32 1.1754944e-38, %v1738
    %v1740 = vsel %vm1737, %v1739, %v1735
    %v1741 = vmul.f32 1.0, %v1740
    %v1742 = vrcp.pop %v1724
    %v1743 = vmul.f32 %v1724, %v1742
    %v1744 = vsub.f32 1.0, %v1743
    %v1745 = vmul.f32 %v1742, %v1744
    %v1746 = vadd.f32 %v1742, %v1745
    %vm1747 = vweird.f32 %v1724
    %vm1748 = vweird.f32 %v1742
    %vm1749 = vmor %vm1747, %vm1748
    %v1750 = vsel %vm1749, %v1742, %v1746
    %v1751 = vand.u32 2147483647, %v1724
    %vm1752 = vcmp.eq.f32.partialorder %v1751, 8.507059e+37
    %v1753 = vand.u32 %v1724, 2147483648
    %v1754 = vor.u32 1.1754944e-38, %v1753
    %v1755 = vsel %vm1752, %v1754, %v1750
    %v1756 = vmul.f32 1.0, %v1755
    %v1757 = vrcp.pop %v1725
    %v1758 = vmul.f32 %v1725, %v1757
    %v1759 = vsub.f32 1.0, %v1758
    %v1760 = vmul.f32 %v1757, %v1759
    %v1761 = vadd.f32 %v1757, %v1760
    %vm1762 = vweird.f32 %v1725
    %vm1763 = vweird.f32 %v1757
    %vm1764 = vmor %vm1762, %vm1763
    %v1765 = vsel %vm1764, %v1757, %v1761
    %v1766 = vand.u32 2147483647, %v1725
    %vm1767 = vcmp.eq.f32.partialorder %v1766, 8.507059e+37
    %v1768 = vand.u32 %v1725, 2147483648
    %v1769 = vor.u32 1.1754944e-38, %v1768
    %v1770 = vsel %vm1767, %v1769, %v1765
    %v1771 = vmul.f32 1.0, %v1770
    %v1772 = vrcp.pop %v1726
    %v1773 = vmul.f32 %v1726, %v1772
    %v1774 = vsub.f32 1.0, %v1773
    %v1775 = vmul.f32 %v1772, %v1774
    %v1776 = vadd.f32 %v1772, %v1775
    %vm1777 = vweird.f32 %v1726
    %vm1778 = vweird.f32 %v1772
    %vm1779 = vmor %vm1777, %vm1778
    %v1780 = vsel %vm1779, %v1772, %v1776
    %v1781 = vand.u32 2147483647, %v1726
    %vm1782 = vcmp.eq.f32.partialorder %v1781, 8.507059e+37
    %v1783 = vand.u32 %v1726, 2147483648
    %v1784 = vor.u32 1.1754944e-38, %v1783
    %v1785 = vsel %vm1782, %v1784, %v1780
    %v1786 = vmul.f32 1.0, %v1785
    %v1789 = vrot.slane %v1708, 4
    %v1790 = vrot.slane %v1710, 4
    %v1793 = vtanh.pop %v1789
    %v1794 = vtanh.pop %v1790
    %v1797 = vrot.slane %v1741, 4
    %v1798 = vrot.slane %v1771, 4
    %v1803 = vrot.slane %v1622, 7
    %v1804 = vrot.slane %v1623, 7
    %v1807 = vmul.f32 %v1797, %v1803
    %v1808 = vmul.f32 %v1798, %v1804
    %v1809 = vmul.f32 %v1741, %v1793
    %v1810 = vmul.f32 %v1771, %v1794
    %v1811 = vadd.f32 %v1807, %v1809
    %v1812 = vadd.f32 %v1808, %v1810
    %v1813 = vtanh.pop %v1811
    %v1814 = vtanh.pop %v1812
    %v1815 = vmul.f32 %v1756, %v1813
    %v1816 = vmul.f32 %v1786, %v1814
    %v1817 = vpack.c.bf16 %v1815, %v1815
    %v1818 = vpack.c.bf16 %v1816, %v1816
    %v1819 = vld [vmem:[%s8] sm:$0xf]
    %v1820 = vld [vmem:[%s8 + $0x4] sm:$0xf]
    %v1821 = vld [vmem:[%s8 + $0x8] sm:$0xf]
    %v1822 = vld [vmem:[%s8 + $0xc] sm:$0xf]
    %v1823 = vld [vmem:[%s8 + $0x10] sm:$0xf]
    %v1824 = vld [vmem:[%s8 + $0x14] sm:$0xf]
    %v1825 = vld [vmem:[%s8 + $0x18] sm:$0xf]
    %v1826 = vld [vmem:[%s8 + $0x1c] sm:$0xf]
    %v1827 = vld [vmem:[%s8 + $0x20] sm:$0xf]
    %v1828 = vld [vmem:[%s8 + $0x24] sm:$0xf]
    %v1829 = vld [vmem:[%s8 + $0x28] sm:$0xf]
    %v1830 = vld [vmem:[%s8 + $0x2c] sm:$0xf]
    %v1831 = vld [vmem:[%s8 + $0x30] sm:$0xf]
    %v1832 = vld [vmem:[%s8 + $0x34] sm:$0xf]
    %v1833 = vld [vmem:[%s8 + $0x38] sm:$0xf]
    %v1834 = vld [vmem:[%s8 + $0x3c] sm:$0xf]
    %v1835 = vld [vmem:[%s9] sm:$0x1]
    %v1837 = vperm.slane %v1835, 0
    %v1841 = vunpack.c.l.b16 %v1817
    %v1842 = vunpack.c.l.b16 %v1818
    %v1843 = vrot.slane %v1841, 3
    %v1844 = vrot.slane %v1842, 2
    %v1845 = vsel %vm306, %v1844, %v1843
    %v1846 = vpack.c.b16 %v1845, %v1845
    %v1864 = vunpack.c.l.b16 %v1819
    %v1865 = vunpack.c.l.b16 %v1820
    %v1866 = vunpack.c.l.b16 %v1821
    %v1867 = vunpack.c.l.b16 %v1822
    %v1868 = vunpack.c.l.b16 %v1823
    %v1869 = vunpack.c.l.b16 %v1824
    %v1870 = vunpack.c.l.b16 %v1825
    %v1871 = vunpack.c.l.b16 %v1826
    %v1872 = vunpack.c.l.b16 %v1827
    %v1873 = vunpack.c.l.b16 %v1828
    %v1874 = vunpack.c.l.b16 %v1829
    %v1875 = vunpack.c.l.b16 %v1830
    %v1876 = vunpack.c.l.b16 %v1831
    %v1877 = vunpack.c.l.b16 %v1832
    %v1878 = vunpack.c.l.b16 %v1833
    %v1879 = vunpack.c.l.b16 %v1834
    %v1880 = vpack.c.b16 %v1865, %v1864
    %v1881 = vpack.c.b16 %v1867, %v1866
    %v1882 = vpack.c.b16 %v1869, %v1868
    %v1883 = vpack.c.b16 %v1871, %v1870
    %v1884 = vpack.c.b16 %v1873, %v1872
    %v1885 = vpack.c.b16 %v1875, %v1874
    %v1886 = vpack.c.b16 %v1877, %v1876
    %v1887 = vpack.c.b16 %v1879, %v1878
    %1896 = vmatpush.bf16.msra.mxu0 %v1887
    %1897 = vmatpush.bf16.msra.mxu0 %v1886
    %1898 = vmatpush.bf16.msra.mxu0 %v1885
    %1899 = vmatpush.bf16.msra.mxu0 %v1884
    %1900 = vmatpush.bf16.msra.mxu0 %v1883
    %1901 = vmatpush.bf16.msra.mxu0 %v1882
    %1902 = vmatpush.bf16.msra.mxu0 %v1881
    %1903 = vmatpush.bf16.msra.mxu0 %v1880
    %1904 = vmatmul.bf16.gmra.mxu0 %v1846
    %v1905 = vpop.f32.mrf.mxu0
    %v1906 = vadd.f32 %v1837, %v1905
    %v1907 = vpop.f32.mrf.mxu0
    %1908 = vdwg.mxu0
    %1909 = vst [vmem:[#allocation3] sm:$0x3] %v1906
    // Predicated region
    $region42: #{cnn1d_lstm_forward.1} parent=1 // pred_check
      _
    $region43: #{cnn1d_lstm_forward.1} parent=1 // pred_check_branch
      %1911 = sbr.rel (0) target = $region45
    $region44: #{cnn1d_lstm_forward.1} parent=1 // pred_region
      %1913 = vsyncadd [#allocation4], 0
      %s1915 = sshll.u32 [#allocation3], 4
      %s1916 = int_to_ptr.vmem [resolvable:$true] %s1915
      %s1917 = sshll.u32 %s10, 4
      %s1918 = int_to_ptr.hbm [resolvable:$true] %s1917
      %1920 = dma.vmem_to_hbm [thread:$0]  %s1916, 32, %s1918, [#allocation4]
    $region45: #{cnn1d_lstm_forward.1} parent=1 // pred_fallthru
      _
    // Predicated region
    $region46: #{cnn1d_lstm_forward.1} parent=1 // pred_check
      _
    $region47: #{cnn1d_lstm_forward.1} parent=1 // pred_check_branch
      %1922 = sbr.rel (0) target = $region49
    $region48: #{cnn1d_lstm_forward.1} parent=1 // pred_region
      %1924 = dma.done [#allocation4], 32
    $region49: #{cnn1d_lstm_forward.1} parent=1 // pred_fallthru
      _
    %1925 = vsyncpa [#allocation4], 1

</llo_original>
